<compile_context>
chip_gen: v7x
topology: tpu7x:2x2x1
jax: 0.10.0
libtpu: 0.0.40
codegen_flags: <defaults>
</compile_context>

<pallas_src>
import functools

import jax
import jax.numpy as jnp
from jax import lax
from jax.experimental import pallas as pl
from jax.experimental.pallas import tpu as pltpu

NEG_BIG = -1e30  # finite "-inf": keeps max()/exp() NaN-free on fully padded tiles


def _sigmoid(x):
    return 1.0 / (1.0 + jnp.exp(-x))


def _gated_attention_kernel(
    feat_ref, wfe_ref, bfe_ref, wvu_ref, bvu_ref, watt_ref,      # inputs
    s_ref, m_out_ref, l_out_ref, acc_out_ref,                    # outputs
    m_ref, l_ref, acc_ref,                                       # scratch
    *, tile_n, n_valid, n_pad, mxu_dtype,
):
    c = pl.program_id(0)                 # core / bag-half index ("parallel")
    t = pl.program_id(1)                 # instance tile within the half ("arbitrary")
    tiles_per_core = pl.num_programs(1)
    dim_d = watt_ref.shape[1]

    @pl.when(t == 0)
    def _init():
        m_ref[...] = jnp.full_like(m_ref, NEG_BIG)
        l_ref[...] = jnp.zeros_like(l_ref)
        acc_ref[...] = jnp.zeros_like(acc_ref)

    def mm(a, b):
        return jnp.dot(a, b, preferred_element_type=jnp.float32)

    # feature_extractor_part2: H = relu(x @ Wfe + b)               (tile_n, L) f32
    h_f32 = jnp.maximum(mm(feat_ref[...], wfe_ref[...]) + bfe_ref[...], 0.0)
    h = h_f32.astype(mxu_dtype)          # cast once; reused by gate + pooling matmuls

    # fused gated-attention projection: one 2D-lane-wide MXU pass  (tile_n, 2D) f32
    z = mm(h, wvu_ref[...]) + bvu_ref[...]
    gate = jnp.tanh(z[:, :dim_d]) * _sigmoid(z[:, dim_d:])        # (tile_n, D) f32

    # lane-dense raw scores: (1, D) . (tile_n, D)^T -> (1, tile_n).
    # attention_weights bias omitted: softmax is shift invariant (exact no-op).
    s = lax.dot_general(
        watt_ref[...], gate.astype(mxu_dtype),
        (((1,), (1,)), ((), ())), preferred_element_type=jnp.float32)

    if n_valid != n_pad:                 # static: emit the mask only if padding exists
        col = (c * tiles_per_core + t) * tile_n + lax.broadcasted_iota(
            jnp.int32, (1, tile_n), 1)
        s = jnp.where(col < n_valid, s, NEG_BIG)

    # raw scores stream out per step (pipelined blocked out_spec); A finalized on host
    s_ref[...] = s

    # online softmax update + MXU bag pooling    acc += p @ H
    m_prev = m_ref[...]
    m_new = jnp.maximum(m_prev, jnp.max(s, axis=1, keepdims=True))
    alpha = jnp.exp(m_prev - m_new)
    p = jnp.exp(s - m_new)                                        # (1, tile_n)
    l_ref[...] = alpha * l_ref[...] + jnp.sum(p, axis=1, keepdims=True)
    acc_ref[...] = alpha * acc_ref[...] + mm(p.astype(mxu_dtype), h)
    m_ref[...] = m_new

    @pl.when(t == tiles_per_core - 1)
    def _emit_partials():                # per-core online-softmax partials
        m_out_ref[...] = m_ref[...]
        l_out_ref[...] = l_ref[...]
        acc_out_ref[...] = acc_ref[...]


def _feature_extractor_part1(x, params):
    """Conv2d(1,20,5)->ReLU->MaxPool2 -> Conv2d(20,50,5)->ReLU->MaxPool2 -> flatten."""
    # TODO(synk): conv/pool feature extractor left to XLA (lax.conv/reduce_window):
    # at 28x28 x {1,20,50} channels every dim is far below the TPU (8,128) tile,
    # so a Pallas conv kernel here would be dominated by layout padding.
    dn = ("NCHW", "OIHW", "NCHW")
    h = lax.conv_general_dilated(x, params["conv1_w"], (1, 1), "VALID",
                                 dimension_numbers=dn)
    h = jnp.maximum(h + params["conv1_b"][None, :, None, None], 0.0)
    h = lax.reduce_window(h, -jnp.inf, lax.max, (1, 1, 2, 2), (1, 1, 2, 2), "VALID")
    h = lax.conv_general_dilated(h, params["conv2_w"], (1, 1), "VALID",
                                 dimension_numbers=dn)
    h = jnp.maximum(h + params["conv2_b"][None, :, None, None], 0.0)
    h = lax.reduce_window(h, -jnp.inf, lax.max, (1, 1, 2, 2), (1, 1, 2, 2), "VALID")
    return h.reshape(h.shape[0], -1)          # (N, 800), matches torch .view(-1, 800)


def gated_attention_forward(x, params, *, tile_n=512, n_cores=2,
                            mxu_dtype=jnp.bfloat16):
    """x: (1, N, 1, 28, 28). Returns (Y_prob (1,1), Y_hat (1,1), A (1,N)).

    tile_n   : instances per grid step (clamped to the bag size, rounded to the
               MXU sublane granularity). 512 fills the 256-row v6e/v7x MXU and
               keeps the double-buffered bf16 feat block at ~1.6 MiB.
    n_cores  : leading "parallel" grid axis; 2 feeds both v7x TensorCores with
               private (m,l,acc) partials. Correct (serial) on 1-TC chips.
    mxu_dtype: MXU operand dtype (bf16 default, f32 accumulation everywhere).
               Pass jnp.float32 for bit-tight agreement with the f32 reference.
    """
    # attention-score bias is a uniform scalar for K=1; the kernel drops it
    # (softmax shift invariance). Guard against per-instance bias shapes.
    assert jnp.size(params["b_att"]) == 1, "b_att must be a scalar (K=1)"

    feat = _feature_extractor_part1(jnp.squeeze(x, axis=0), params)   # (N, 800) f32
    n, dim_f = feat.shape
    dim_l = params["w_fe"].shape[1]
    dim_d = params["wv"].shape[1]

    min_rows = 16 if mxu_dtype == jnp.bfloat16 else 8     # sublane packing granularity
    tile_n = min(tile_n, pl.cdiv(n, min_rows) * min_rows)
    tile_n = max(min_rows, (tile_n // min_rows) * min_rows)

    n_real_tiles = pl.cdiv(n, tile_n)
    n_cores = max(1, min(n_cores, n_real_tiles))
    tiles_per_core = pl.cdiv(n_real_tiles, n_cores)
    n_tiles = n_cores * tiles_per_core
    n_pad = n_tiles * tile_n
    if n_pad != n:
        feat = jnp.pad(feat, ((0, n_pad - n), (0, 0)))

    # MXU operands in mxu_dtype (bf16 default); biases and softmax math stay f32.
    feat = feat.astype(mxu_dtype)
    w_fe = params["w_fe"].astype(mxu_dtype)
    w_vu = jnp.concatenate([params["wv"], params["wu"]], axis=1).astype(mxu_dtype)
    b_vu = jnp.concatenate([params["bv"], params["bu"]], axis=1)
    w_att = params["w_att"].astype(mxu_dtype)

    kernel = functools.partial(_gated_attention_kernel, tile_n=tile_n,
                               n_valid=n, n_pad=n_pad, mxu_dtype=mxu_dtype)
    resident = lambda c, t: (0, 0)
    tiled = lambda c, t: (c * tiles_per_core + t, 0)

    s_tiles, m_parts, l_parts, acc_parts = pl.pallas_call(
        kernel,
        grid_spec=pltpu.PrefetchScalarGridSpec(
            num_scalar_prefetch=0,
            grid=(n_cores, tiles_per_core),
            in_specs=[
                pl.BlockSpec((tile_n, dim_f), tiled),          # instance features
                pl.BlockSpec((dim_f, dim_l), resident),        # w_fe
                pl.BlockSpec((1, dim_l), resident),            # b_fe
                pl.BlockSpec((dim_l, 2 * dim_d), resident),    # wv || wu (fused)
                pl.BlockSpec((1, 2 * dim_d), resident),        # bv || bu (fused)
                pl.BlockSpec((1, dim_d), resident),            # w_att
            ],
            out_specs=(
                pl.BlockSpec((1, tile_n), tiled),              # raw scores (lane-dense)
                pl.BlockSpec((1, 1), lambda c, t: (c, 0)),     # per-core max partial
                pl.BlockSpec((1, 1), lambda c, t: (c, 0)),     # per-core sum partial
                pl.BlockSpec((1, dim_l), lambda c, t: (c, 0)), # per-core acc partial
            ),
            scratch_shapes=[
                pltpu.VMEM((1, 1), jnp.float32),               # running max
                pltpu.VMEM((1, 1), jnp.float32),               # running sum
                pltpu.VMEM((1, dim_l), jnp.float32),           # unnormalized bag vector
            ],
        ),
        out_shape=(
            jax.ShapeDtypeStruct((n_tiles, tile_n), jnp.float32),
            jax.ShapeDtypeStruct((n_cores, 1), jnp.float32),
            jax.ShapeDtypeStruct((n_cores, 1), jnp.float32),
            jax.ShapeDtypeStruct((n_cores, dim_l), jnp.float32),
        ),
        compiler_params=pltpu.CompilerParams(
            dimension_semantics=("parallel", "arbitrary"),
        ),
    )(feat, w_fe, params["b_fe"], w_vu, b_vu, w_att)

    # Exact cross-core logsumexp combine + classifier + A rescale: O(L + N)
    # fused host ops (trivial next to the per-instance MLP done in the kernel).
    m_fin = jnp.max(m_parts)                                   # scalar
    scale = jnp.exp(m_parts - m_fin)                           # (n_cores, 1)
    l_fin = jnp.sum(l_parts * scale)
    m_bag = jnp.sum(acc_parts * scale, axis=0, keepdims=True) / l_fin   # (1, L)
    logit = jnp.sum(m_bag * params["wc"], axis=1, keepdims=True) + params["bc"]
    y_prob = _sigmoid(logit)
    y_hat = (y_prob >= 0.5).astype(jnp.float32)
    # (n_tiles, tile_n) -> (1, N): row-major reshape, padded slots exp() to 0.
    a = (jnp.exp(s_tiles - m_fin) / l_fin).reshape(1, n_pad)[:, :n]
    return y_prob, y_hat, a


def gated_attention_reference(x, params):
    """Pure-JAX mirror of PyTorch GatedAttention.forward (f32, highest precision)."""
    mm = functools.partial(jnp.dot, precision=jax.lax.Precision.HIGHEST)
    feat = _feature_extractor_part1(jnp.squeeze(x, axis=0), params)
    h = jnp.maximum(mm(feat, params["w_fe"]) + params["b_fe"], 0.0)
    a_v = jnp.tanh(mm(h, params["wv"]) + params["bv"])
    a_u = _sigmoid(mm(h, params["wu"]) + params["bu"])
    s = mm(a_v * a_u, params["w_att"].T) + params["b_att"]          # (N, 1)
    a = jax.nn.softmax(s.T, axis=1)                                 # (1, N)
    m = mm(a, h)                                                    # (1, L)
    y_prob = _sigmoid(jnp.sum(m * params["wc"], axis=1, keepdims=True) + params["bc"])
    y_hat = (y_prob >= 0.5).astype(jnp.float32)
    return y_prob, y_hat, a


def init_params(key):
    # PyTorch Linear(in, out) stores (out, in); we store (in, out) so the kernel
    # computes x @ W. L=500, D=128, K=1 as in the module; conv stack is fixed.
    dim_f, dim_l, dim_d = 50 * 4 * 4, 500, 128
    ks = jax.random.split(key, 12)
    s = 0.1
    return {
        "conv1_w": s * jax.random.normal(ks[0], (20, 1, 5, 5), jnp.float32),
        "conv1_b": s * jax.random.normal(ks[1], (20,), jnp.float32),
        "conv2_w": s * jax.random.normal(ks[2], (50, 20, 5, 5), jnp.float32),
        "conv2_b": s * jax.random.normal(ks[3], (50,), jnp.float32),
        "w_fe": s * jax.random.normal(ks[4], (dim_f, dim_l), jnp.float32),
        "b_fe": s * jax.random.normal(ks[5], (1, dim_l), jnp.float32),
        "wv": s * jax.random.normal(ks[6], (dim_l, dim_d), jnp.float32),
        "bv": s * jax.random.normal(ks[7], (1, dim_d), jnp.float32),
        "wu": s * jax.random.normal(ks[8], (dim_l, dim_d), jnp.float32),
        "bu": s * jax.random.normal(ks[9], (1, dim_d), jnp.float32),
        "w_att": s * jax.random.normal(ks[10], (1, dim_d), jnp.float32),
        "b_att": jnp.float32(0.05),                 # dropped in-kernel (shift-invariant)
        "wc": s * jax.random.normal(ks[11], (1, dim_l), jnp.float32),
        "bc": jnp.full((1, 1), 0.02, jnp.float32),
    }


if __name__ == "__main__":
    key = jax.random.PRNGKey(0)
    kx, kp = jax.random.split(key)

    bag_size = 40                                 # N instances (28x28 images) per bag
    x = jax.random.normal(kx, (1, bag_size, 1, 28, 28), jnp.float32)
    params = init_params(kp)

    y_ref, y_hat_ref, a_ref = gated_attention_reference(x, params)

    # Default path: bf16 MXU operands, large tile (clamped to the bag size).
    y1, yh1, a1 = gated_attention_forward(x, params)
    jax.block_until_ready((y1, yh1, a1))
    assert y1.shape == (1, 1) and yh1.shape == (1, 1) and a1.shape == (1, bag_size)
    assert jnp.allclose(y1, y_ref, atol=5e-2, rtol=5e-2)
    assert jnp.allclose(a1, a_ref, atol=5e-2, rtol=5e-2)

    # bf16, forced multi-tile / two-partial path: exercises padding mask,
    # online softmax across tiles and the cross-core logsumexp combine.
    y2, yh2, a2 = gated_attention_forward(x, params, tile_n=16, n_cores=2,
                                          mxu_dtype=jnp.bfloat16)
    jax.block_until_ready((y2, yh2, a2))
    assert jnp.allclose(y2, y_ref, atol=5e-2, rtol=5e-2)
    assert jnp.allclose(a2, a_ref, atol=5e-2, rtol=5e-2)

    # f32 MXU path, multi-tile with a fully padded trailing tile: tight check.
    y3, yh3, a3 = gated_attention_forward(x, params, tile_n=8, n_cores=2,
                                          mxu_dtype=jnp.float32)
    jax.block_until_ready((y3, yh3, a3))
    assert jnp.allclose(y3, y_ref, atol=1e-4, rtol=1e-4)
    assert jnp.allclose(a3, a_ref, atol=1e-4, rtol=1e-4)
    assert jnp.array_equal(yh3, y_hat_ref)

    print("KERNEL_OK")
</pallas_src>

<mosaic_0001>
module attributes {stable_mosaic.version = 11 : i64} {
  func.func @_gated_attention_kernel(%arg0: i32, %arg1: i32, %arg2: memref<48x800xbf16, #tpu.memory_space<vmem>>, %arg3: memref<800x500xbf16, #tpu.memory_space<vmem>>, %arg4: memref<1x500xf32, #tpu.memory_space<vmem>>, %arg5: memref<500x256xbf16, #tpu.memory_space<vmem>>, %arg6: memref<1x256xf32, #tpu.memory_space<vmem>>, %arg7: memref<1x128xbf16, #tpu.memory_space<vmem>>, %arg8: memref<1x48xf32, #tpu.memory_space<vmem>>, %arg9: memref<1x1xf32, #tpu.memory_space<vmem>>, %arg10: memref<1x1xf32, #tpu.memory_space<vmem>>, %arg11: memref<1x500xf32, #tpu.memory_space<vmem>>, %arg12: memref<1x1xf32, #tpu.memory_space<vmem>>, %arg13: memref<1x1xf32, #tpu.memory_space<vmem>>, %arg14: memref<1x500xf32, #tpu.memory_space<vmem>>) attributes {dimension_semantics = [#tpu.dimension_semantics<parallel>, #tpu.dimension_semantics<arbitrary>], iteration_bounds = array<i64: 1, 1>, scalar_prefetch = 0 : i64, scratch_operands = 3 : i64, tpu.core_type = #tpu.core_type<tc>, window_params = [{transform_indices = @transform_0, window_bounds = array<i64: 48, 800>}, {pipeline_mode = #tpu.pipeline_mode<synchronous>, transform_indices = @transform_1, window_bounds = array<i64: 800, 500>}, {pipeline_mode = #tpu.pipeline_mode<synchronous>, transform_indices = @transform_2, window_bounds = array<i64: 1, 500>}, {pipeline_mode = #tpu.pipeline_mode<synchronous>, transform_indices = @transform_3, window_bounds = array<i64: 500, 256>}, {pipeline_mode = #tpu.pipeline_mode<synchronous>, transform_indices = @transform_4, window_bounds = array<i64: 1, 256>}, {pipeline_mode = #tpu.pipeline_mode<synchronous>, transform_indices = @transform_5, window_bounds = array<i64: 1, 128>}, {transform_indices = @transform_6, window_bounds = array<i64: 1, 48>}, {transform_indices = @transform_7, window_bounds = array<i64: 1, 1>}, {transform_indices = @transform_8, window_bounds = array<i64: 1, 1>}, {transform_indices = @transform_9, window_bounds = array<i64: 1, 500>}]} {
    %c0_i32 = arith.constant 0 : i32
    %0 = arith.cmpi eq, %arg1, %c0_i32 : i32
    %1 = arith.extui %0 : i1 to i32
    %c0_i32_0 = arith.constant 0 : i32
    %2 = arith.cmpi ne, %1, %c0_i32_0 : i32
    scf.if %2 {
      %cst_38 = arith.constant -1.000000e+30 : f32
      %68 = vector.broadcast %cst_38 : f32 to vector<1x1xf32>
      %c0_39 = arith.constant 0 : index
      %c0_40 = arith.constant 0 : index
      %69 = vector.load %arg12[%c0_39, %c0_40] : memref<1x1xf32, #tpu.memory_space<vmem>>, vector<1x1xf32>
      tpu.vector_store %arg12[%c0_39, %c0_40], %68 {strides = array<i32>} : memref<1x1xf32, #tpu.memory_space<vmem>>, vector<1x1xf32>,
      %cst_41 = arith.constant 0.000000e+00 : f32
      %70 = vector.broadcast %cst_41 : f32 to vector<1x1xf32>
      %c0_42 = arith.constant 0 : index
      %c0_43 = arith.constant 0 : index
      %71 = vector.load %arg13[%c0_42, %c0_43] : memref<1x1xf32, #tpu.memory_space<vmem>>, vector<1x1xf32>
      tpu.vector_store %arg13[%c0_42, %c0_43], %70 {strides = array<i32>} : memref<1x1xf32, #tpu.memory_space<vmem>>, vector<1x1xf32>,
      %cst_44 = arith.constant 0.000000e+00 : f32
      %72 = vector.broadcast %cst_44 : f32 to vector<1x500xf32>
      %c0_45 = arith.constant 0 : index
      %c0_46 = arith.constant 0 : index
      %73 = vector.load %arg14[%c0_45, %c0_46] : memref<1x500xf32, #tpu.memory_space<vmem>>, vector<1x500xf32>
      tpu.vector_store %arg14[%c0_45, %c0_46], %72 {strides = array<i32>} : memref<1x500xf32, #tpu.memory_space<vmem>>, vector<1x500xf32>,
    } else {
    }
    %c0 = arith.constant 0 : index
    %c0_1 = arith.constant 0 : index
    %3 = vector.load %arg2[%c0, %c0_1] : memref<48x800xbf16, #tpu.memory_space<vmem>>, vector<48x800xbf16>
    %c0_2 = arith.constant 0 : index
    %c0_3 = arith.constant 0 : index
    %4 = vector.load %arg3[%c0_2, %c0_3] : memref<800x500xbf16, #tpu.memory_space<vmem>>, vector<800x500xbf16>
    %cst = arith.constant dense<0.000000e+00> : vector<48x500xf32>
    %5 = tpu.matmul %3, %4, %cst {dimension_numbers = #tpu.dot_dimension_numbers<[1], [0], [0], [1], [0, 0, 1, 1], [], []>} : vector<48x800xbf16>, vector<800x500xbf16>, vector<48x500xf32> -> vector<48x500xf32>
    %c0_4 = arith.constant 0 : index
    %c0_5 = arith.constant 0 : index
    %6 = vector.load %arg4[%c0_4, %c0_5] : memref<1x500xf32, #tpu.memory_space<vmem>>, vector<1x500xf32>
    %7 = vector.broadcast %6 : vector<1x500xf32> to vector<48x500xf32>
    %8 = arith.addf %5, %7 : vector<48x500xf32>
    %cst_6 = arith.constant 0.000000e+00 : f32
    %9 = vector.broadcast %cst_6 : f32 to vector<48x500xf32>
    %10 = arith.maximumf %8, %9 : vector<48x500xf32>
    %11 = arith.truncf %10 : vector<48x500xf32> to vector<48x500xbf16>
    %c0_7 = arith.constant 0 : index
    %c0_8 = arith.constant 0 : index
    %12 = vector.load %arg5[%c0_7, %c0_8] : memref<500x256xbf16, #tpu.memory_space<vmem>>, vector<500x256xbf16>
    %cst_9 = arith.constant dense<0.000000e+00> : vector<48x256xf32>
    %13 = tpu.matmul %11, %12, %cst_9 {dimension_numbers = #tpu.dot_dimension_numbers<[1], [0], [0], [1], [0, 0, 1, 1], [], []>} : vector<48x500xbf16>, vector<500x256xbf16>, vector<48x256xf32> -> vector<48x256xf32>
    %c0_10 = arith.constant 0 : index
    %c0_11 = arith.constant 0 : index
    %14 = vector.load %arg6[%c0_10, %c0_11] : memref<1x256xf32, #tpu.memory_space<vmem>>, vector<1x256xf32>
    %15 = vector.broadcast %14 : vector<1x256xf32> to vector<48x256xf32>
    %16 = arith.addf %13, %15 : vector<48x256xf32>
    %17 = vector.extract_strided_slice %16 {offsets = [0, 0], sizes = [48, 128], strides = [1, 1]} : vector<48x256xf32> to vector<48x128xf32>
    %18 = math.tanh %17 : vector<48x128xf32>
    %19 = vector.extract_strided_slice %16 {offsets = [0, 128], sizes = [48, 128], strides = [1, 1]} : vector<48x256xf32> to vector<48x128xf32>
    %cst_12 = arith.constant 0.000000e+00 : f32
    %20 = vector.broadcast %cst_12 : f32 to vector<48x128xf32>
    %21 = arith.subf %20, %19 : vector<48x128xf32>
    %22 = math.exp %21 : vector<48x128xf32>
    %cst_13 = arith.constant 1.000000e+00 : f32
    %23 = vector.broadcast %cst_13 : f32 to vector<48x128xf32>
    %24 = arith.addf %23, %22 : vector<48x128xf32>
    %cst_14 = arith.constant 1.000000e+00 : f32
    %25 = vector.broadcast %cst_14 : f32 to vector<48x128xf32>
    %26 = arith.divf %25, %24 : vector<48x128xf32>
    %27 = arith.mulf %18, %26 : vector<48x128xf32>
    %c0_15 = arith.constant 0 : index
    %c0_16 = arith.constant 0 : index
    %28 = vector.load %arg7[%c0_15, %c0_16] : memref<1x128xbf16, #tpu.memory_space<vmem>>, vector<1x128xbf16>
    %29 = arith.truncf %27 : vector<48x128xf32> to vector<48x128xbf16>
    %cst_17 = arith.constant dense<0.000000e+00> : vector<1x48xf32>
    %30 = tpu.matmul %28, %29, %cst_17 {dimension_numbers = #tpu.dot_dimension_numbers<[1], [1], [0], [0], [0, 0, 1, 0], [], []>} : vector<1x128xbf16>, vector<48x128xbf16>, vector<1x48xf32> -> vector<1x48xf32>
    %c1_i32 = arith.constant 1 : i32
    %31 = arith.muli %arg0, %c1_i32 : i32
    %32 = arith.addi %31, %arg1 : i32
    %c48_i32 = arith.constant 48 : i32
    %33 = arith.muli %32, %c48_i32 : i32
    %34 = tpu.iota {dimensions = array<i32: 1>} : vector<1x48xi32>
    %35 = vector.broadcast %33 : i32 to vector<1x48xi32>
    %36 = arith.addi %35, %34 : vector<1x48xi32>
    %c40_i32 = arith.constant 40 : i32
    %37 = vector.broadcast %c40_i32 : i32 to vector<1x48xi32>
    %38 = arith.cmpi slt, %36, %37 : vector<1x48xi32>
    %cst_18 = arith.constant -1.000000e+30 : f32
    %39 = vector.broadcast %cst_18 : f32 to vector<1x48xf32>
    %40 = arith.select %38, %30, %39 : vector<1x48xi1>, vector<1x48xf32>
    %c0_19 = arith.constant 0 : index
    %c0_20 = arith.constant 0 : index
    %41 = vector.load %arg8[%c0_19, %c0_20] : memref<1x48xf32, #tpu.memory_space<vmem>>, vector<1x48xf32>
    tpu.vector_store %arg8[%c0_19, %c0_20], %40 {strides = array<i32>} : memref<1x48xf32, #tpu.memory_space<vmem>>, vector<1x48xf32>,
    %c0_21 = arith.constant 0 : index
    %c0_22 = arith.constant 0 : index
    %42 = vector.load %arg12[%c0_21, %c0_22] : memref<1x1xf32, #tpu.memory_space<vmem>>, vector<1x1xf32>
    %cst_23 = arith.constant dense<0xFF800000> : vector<1xf32>
    %43 = vector.multi_reduction <maximumf>, %40, %cst_23 [1] : vector<1x48xf32> to vector<1xf32>
    %44 = vector.shape_cast %43 : vector<1xf32> to vector<1x1xf32>
    %45 = arith.maximumf %42, %44 : vector<1x1xf32>
    %46 = arith.subf %42, %45 : vector<1x1xf32>
    %47 = math.exp %46 : vector<1x1xf32>
    %48 = vector.broadcast %45 : vector<1x1xf32> to vector<1x48xf32>
    %49 = arith.subf %40, %48 : vector<1x48xf32>
    %50 = math.exp %49 : vector<1x48xf32>
    %c0_24 = arith.constant 0 : index
    %c0_25 = arith.constant 0 : index
    %51 = vector.load %arg13[%c0_24, %c0_25] : memref<1x1xf32, #tpu.memory_space<vmem>>, vector<1x1xf32>
    %52 = arith.mulf %47, %51 : vector<1x1xf32>
    %cst_26 = arith.constant dense<0.000000e+00> : vector<1xf32>
    %53 = vector.multi_reduction <add>, %50, %cst_26 [1] : vector<1x48xf32> to vector<1xf32>
    %54 = vector.shape_cast %53 : vector<1xf32> to vector<1x1xf32>
    %55 = arith.addf %52, %54 : vector<1x1xf32>
    %c0_27 = arith.constant 0 : index
    %c0_28 = arith.constant 0 : index
    %56 = vector.load %arg13[%c0_27, %c0_28] : memref<1x1xf32, #tpu.memory_space<vmem>>, vector<1x1xf32>
    tpu.vector_store %arg13[%c0_27, %c0_28], %55 {strides = array<i32>} : memref<1x1xf32, #tpu.memory_space<vmem>>, vector<1x1xf32>,
    %c0_29 = arith.constant 0 : index
    %c0_30 = arith.constant 0 : index
    %57 = vector.load %arg14[%c0_29, %c0_30] : memref<1x500xf32, #tpu.memory_space<vmem>>, vector<1x500xf32>
    %58 = vector.broadcast %47 : vector<1x1xf32> to vector<1x500xf32>
    %59 = arith.mulf %58, %57 : vector<1x500xf32>
    %60 = arith.truncf %50 : vector<1x48xf32> to vector<1x48xbf16>
    %cst_31 = arith.constant dense<0.000000e+00> : vector<1x500xf32>
    %61 = tpu.matmul %60, %11, %cst_31 {dimension_numbers = #tpu.dot_dimension_numbers<[1], [0], [0], [1], [0, 0, 1, 1], [], []>} : vector<1x48xbf16>, vector<48x500xbf16>, vector<1x500xf32> -> vector<1x500xf32>
    %62 = arith.addf %59, %61 : vector<1x500xf32>
    %c0_32 = arith.constant 0 : index
    %c0_33 = arith.constant 0 : index
    %63 = vector.load %arg14[%c0_32, %c0_33] : memref<1x500xf32, #tpu.memory_space<vmem>>, vector<1x500xf32>
    tpu.vector_store %arg14[%c0_32, %c0_33], %62 {strides = array<i32>} : memref<1x500xf32, #tpu.memory_space<vmem>>, vector<1x500xf32>,
    %c0_34 = arith.constant 0 : index
    %c0_35 = arith.constant 0 : index
    %64 = vector.load %arg12[%c0_34, %c0_35] : memref<1x1xf32, #tpu.memory_space<vmem>>, vector<1x1xf32>
    tpu.vector_store %arg12[%c0_34, %c0_35], %45 {strides = array<i32>} : memref<1x1xf32, #tpu.memory_space<vmem>>, vector<1x1xf32>,
    %c0_i32_36 = arith.constant 0 : i32
    %65 = arith.cmpi eq, %arg1, %c0_i32_36 : i32
    %66 = arith.extui %65 : i1 to i32
    %c0_i32_37 = arith.constant 0 : i32
    %67 = arith.cmpi ne, %66, %c0_i32_37 : i32
    scf.if %67 {
      %c0_38 = arith.constant 0 : index
      %c0_39 = arith.constant 0 : index
      %68 = vector.load %arg12[%c0_38, %c0_39] : memref<1x1xf32, #tpu.memory_space<vmem>>, vector<1x1xf32>
      %c0_40 = arith.constant 0 : index
      %c0_41 = arith.constant 0 : index
      %69 = vector.load %arg9[%c0_40, %c0_41] : memref<1x1xf32, #tpu.memory_space<vmem>>, vector<1x1xf32>
      tpu.vector_store %arg9[%c0_40, %c0_41], %68 {strides = array<i32>} : memref<1x1xf32, #tpu.memory_space<vmem>>, vector<1x1xf32>,
      %c0_42 = arith.constant 0 : index
      %c0_43 = arith.constant 0 : index
      %70 = vector.load %arg13[%c0_42, %c0_43] : memref<1x1xf32, #tpu.memory_space<vmem>>, vector<1x1xf32>
      %c0_44 = arith.constant 0 : index
      %c0_45 = arith.constant 0 : index
      %71 = vector.load %arg10[%c0_44, %c0_45] : memref<1x1xf32, #tpu.memory_space<vmem>>, vector<1x1xf32>
      tpu.vector_store %arg10[%c0_44, %c0_45], %70 {strides = array<i32>} : memref<1x1xf32, #tpu.memory_space<vmem>>, vector<1x1xf32>,
      %c0_46 = arith.constant 0 : index
      %c0_47 = arith.constant 0 : index
      %72 = vector.load %arg14[%c0_46, %c0_47] : memref<1x500xf32, #tpu.memory_space<vmem>>, vector<1x500xf32>
      %c0_48 = arith.constant 0 : index
      %c0_49 = arith.constant 0 : index
      %73 = vector.load %arg11[%c0_48, %c0_49] : memref<1x500xf32, #tpu.memory_space<vmem>>, vector<1x500xf32>
      tpu.vector_store %arg11[%c0_48, %c0_49], %72 {strides = array<i32>} : memref<1x500xf32, #tpu.memory_space<vmem>>, vector<1x500xf32>,
    } else {
    }
    return
  }
  func.func @transform_0(%arg0: i32, %arg1: i32) -> (i32, i32) {
    %c1_i32 = arith.constant 1 : i32
    %0 = arith.muli %arg0, %c1_i32 : i32
    %1 = arith.addi %0, %arg1 : i32
    %c0_i32 = arith.constant 0 : i32
    %c0_i32_0 = arith.constant 0 : i32
    return %1, %c0_i32 : i32, i32
  }
  func.func @transform_1(%arg0: i32, %arg1: i32) -> (i32, i32) {
    %c0_i32 = arith.constant 0 : i32
    %c0_i32_0 = arith.constant 0 : i32
    %c0_i32_1 = arith.constant 0 : i32
    return %c0_i32, %c0_i32_0 : i32, i32
  }
  func.func @transform_2(%arg0: i32, %arg1: i32) -> (i32, i32) {
    %c0_i32 = arith.constant 0 : i32
    %c0_i32_0 = arith.constant 0 : i32
    %c0_i32_1 = arith.constant 0 : i32
    return %c0_i32, %c0_i32_0 : i32, i32
  }
  func.func @transform_3(%arg0: i32, %arg1: i32) -> (i32, i32) {
    %c0_i32 = arith.constant 0 : i32
    %c0_i32_0 = arith.constant 0 : i32
    %c0_i32_1 = arith.constant 0 : i32
    return %c0_i32, %c0_i32_0 : i32, i32
  }
  func.func @transform_4(%arg0: i32, %arg1: i32) -> (i32, i32) {
    %c0_i32 = arith.constant 0 : i32
    %c0_i32_0 = arith.constant 0 : i32
    %c0_i32_1 = arith.constant 0 : i32
    return %c0_i32, %c0_i32_0 : i32, i32
  }
  func.func @transform_5(%arg0: i32, %arg1: i32) -> (i32, i32) {
    %c0_i32 = arith.constant 0 : i32
    %c0_i32_0 = arith.constant 0 : i32
    %c0_i32_1 = arith.constant 0 : i32
    return %c0_i32, %c0_i32_0 : i32, i32
  }
  func.func @transform_6(%arg0: i32, %arg1: i32) -> (i32, i32) {
    %c1_i32 = arith.constant 1 : i32
    %0 = arith.muli %arg0, %c1_i32 : i32
    %1 = arith.addi %0, %arg1 : i32
    %c0_i32 = arith.constant 0 : i32
    %c0_i32_0 = arith.constant 0 : i32
    return %1, %c0_i32 : i32, i32
  }
  func.func @transform_7(%arg0: i32, %arg1: i32) -> (i32, i32) {
    %c0_i32 = arith.constant 0 : i32
    %c0_i32_0 = arith.constant 0 : i32
    return %arg0, %c0_i32 : i32, i32
  }
  func.func @transform_8(%arg0: i32, %arg1: i32) -> (i32, i32) {
    %c0_i32 = arith.constant 0 : i32
    %c0_i32_0 = arith.constant 0 : i32
    return %arg0, %c0_i32 : i32, i32
  }
  func.func @transform_9(%arg0: i32, %arg1: i32) -> (i32, i32) {
    %c0_i32 = arith.constant 0 : i32
    %c0_i32_0 = arith.constant 0 : i32
    return %arg0, %c0_i32 : i32, i32
  }
}

</mosaic_0001>

<llo_original>
// kernel: tpu_custom_call.1
$region0: #{tpu_custom_call.1}
  #allocation0 [shape = 'u32[]', space=smem, size = 0x4, offset = 0x4, fixed_abs, tag = 'smem constant byte address 0x4 - core index']
  #allocation1 [shape = 'u32[144,128]{1,0:T(1,128)}', space=vmem, size = 0x12000, scoped, tag = 'internal scratch']
  #allocation2 [shape = 'f32[1,1]{1,0:T(1,128)}', space=vmem, size = 0x200, scoped, tag = 'scratch operand']
  #allocation3 [shape = 'f32[1,1]{1,0:T(1,128)}', space=vmem, size = 0x200, scoped, tag = 'scratch operand']
  #allocation4 [shape = 'f32[1,500]{1,0:T(1,128)}', space=vmem, size = 0x800, scoped, tag = 'scratch operand']
  %s0 = inlined_call_operand.hbm [shape: bf16[48,800], index: 0, kind: input, shape index: {}]
  %s1 = inlined_call_operand.hbm [shape: bf16[800,500], index: 1, kind: input, shape index: {}]
  %s2 = inlined_call_operand.vmem [shape: f32[1,500], index: 2, kind: input, shape index: {}]
  %s3 = inlined_call_operand.hbm [shape: bf16[500,256], index: 3, kind: input, shape index: {}]
  %s4 = inlined_call_operand.vmem [shape: f32[1,256], index: 4, kind: input, shape index: {}]
  %s5 = inlined_call_operand.vmem [shape: bf16[1,128], index: 5, kind: input, shape index: {}]
  %s6 = inlined_call_operand.hbm [shape: f32[1,48], index: 6, kind: output, shape index: {0}]
  %s7 = inlined_call_operand.hbm [shape: f32[1,1], index: 7, kind: output, shape index: {1}]
  %s8 = inlined_call_operand.hbm [shape: f32[1,1], index: 8, kind: output, shape index: {2}]
  %s9 = inlined_call_operand.hbm [shape: f32[1,500], index: 9, kind: output, shape index: {3}]
  %10 = xla_tuple %s6, %s7, %s8, %s9
  %s11 = sld [smem:[#allocation0]]
  $region78: #{tpu_custom_call.1} parent=0
    _
  %s13 = ssub.s32 1, %s11
  %s14 = scalar_select 0, %s13, %s11
  $region1: #{tpu_custom_call.1} parent=0
    #allocation5 [shape = 'u8[86016]{0}', space=vmem, size = 0x15000, scoped, tag = 'input window, operand 0, single buffered']
    #allocation6 [shape = 's32[1]{0}', space=sflag, size = 0x4, scoped, tag = 'scoped memory for tpu_custom_call.1']
    #allocation7 [shape = 's32[1]{0}', space=sflag, size = 0x4, scoped, tag = 'scoped memory for tpu_custom_call.1']
    #allocation8 [shape = 'u8[819200]{0}', space=vmem, size = 0xc8000, scoped, tag = 'input window, operand 1, single buffered']
    #allocation9 [shape = 's32[1]{0}', space=sflag, size = 0x4, scoped, tag = 'scoped memory for tpu_custom_call.1']
    #allocation10 [shape = 'u8[258048]{0}', space=vmem, size = 0x3f000, scoped, tag = 'input window, operand 3, single buffered']
    #allocation11 [shape = 'u8[512]{0}', space=vmem, size = 0x400, scoped, tag = 'output window, operand 0, single buffered']
    #allocation12 [shape = 'u8[512]{0}', space=vmem, size = 0x400, scoped, tag = 'output window, operand 1, single buffered']
    #allocation13 [shape = 's32[1]{0}', space=sflag, size = 0x4, scoped, tag = 'scoped memory for tpu_custom_call.1']
    #allocation14 [shape = 'u8[512]{0}', space=vmem, size = 0x400, scoped, tag = 'output window, operand 2, single buffered']
    #allocation15 [shape = 'u8[2048]{0}', space=vmem, size = 0x800, scoped, tag = 'output window, operand 3, single buffered']
    #allocation16 [shape = 's32[1]{0}', space=sflag, size = 0x4, scoped, tag = 'scoped memory for tpu_custom_call.1']
    %15 = vsyncpa [#allocation6], 0
    %16 = vsyncpa [#allocation9], 0
    %17 = vsyncpa [#allocation7], 0
    %18 = vsyncpa [#allocation13], 0
    %19 = vsyncpa [#allocation16], 0
    // Predicated region
    $region2: #{tpu_custom_call.1} parent=1 // pred_check
      _
    $region3: #{tpu_custom_call.1} parent=1 // pred_check_branch
      %21 = sbr.rel (0) target = $region5
    $region4: #{tpu_custom_call.1} parent=1 // pred_region
      %s22 = sadd.s32 0, 0
      %s23 = smul.u32 6, %s22
      %s25 = ssub.s32 2688, 2688
      %26 = vsyncadd [#allocation6], %s25
      %s27 = smul.addr %s23, 7
      %s28 = smul.addr %s27, 64
      %s29 = scalar_lea.hbm %s0, %s28
      %s30 = sshll.u32 [#allocation5], 4
      %s31 = int_to_ptr.vmem [resolvable:$true] %s30
      %36 = dma.hbm_to_vmem [thread:$0]  %s29, 2688, %s31, [#allocation6], 448, 448, 28
    $region5: #{tpu_custom_call.1} parent=1 // pred_fallthru
      _
    // Predicated region
    $region6: #{tpu_custom_call.1} parent=1 // pred_check
      _
    $region7: #{tpu_custom_call.1} parent=1 // pred_check_branch
      %38 = sbr.rel (0) target = $region9
    $region8: #{tpu_custom_call.1} parent=1 // pred_region
      %s40 = ssub.s32 25600, 25600
      %41 = vsyncadd [#allocation9], %s40
      %s42 = sshll.u32 [#allocation8], 4
      %s43 = int_to_ptr.vmem [resolvable:$true] %s42
      %48 = dma.hbm_to_vmem [thread:$0]  %s1, 25600, %s43, [#allocation9], 256, 256, 16
    $region9: #{tpu_custom_call.1} parent=1 // pred_fallthru
      _
    // Predicated region
    $region10: #{tpu_custom_call.1} parent=1 // pred_check
      _
    $region11: #{tpu_custom_call.1} parent=1 // pred_check_branch
      %50 = sbr.rel (0) target = $region13
    $region12: #{tpu_custom_call.1} parent=1 // pred_region
      _
    $region13: #{tpu_custom_call.1} parent=1 // pred_fallthru
      _
    // Predicated region
    $region14: #{tpu_custom_call.1} parent=1 // pred_check
      _
    $region15: #{tpu_custom_call.1} parent=1 // pred_check_branch
      %52 = sbr.rel (0) target = $region17
    $region16: #{tpu_custom_call.1} parent=1 // pred_region
      %s54 = ssub.s32 8064, 8064
      %55 = vsyncadd [#allocation9], %s54
      %s56 = sshll.u32 [#allocation10], 4
      %s57 = int_to_ptr.vmem [resolvable:$true] %s56
      %62 = dma.hbm_to_vmem [thread:$0]  %s3, 8064, %s57, [#allocation9], 128, 128, 8
    $region17: #{tpu_custom_call.1} parent=1 // pred_fallthru
      _
    // Predicated region
    $region18: #{tpu_custom_call.1} parent=1 // pred_check
      _
    $region19: #{tpu_custom_call.1} parent=1 // pred_check_branch
      %64 = sbr.rel (0) target = $region21
    $region20: #{tpu_custom_call.1} parent=1 // pred_region
      _
    $region21: #{tpu_custom_call.1} parent=1 // pred_fallthru
      _
    // Predicated region
    $region22: #{tpu_custom_call.1} parent=1 // pred_check
      _
    $region23: #{tpu_custom_call.1} parent=1 // pred_check_branch
      %66 = sbr.rel (0) target = $region25
    $region24: #{tpu_custom_call.1} parent=1 // pred_region
      _
    $region25: #{tpu_custom_call.1} parent=1 // pred_fallthru
      _
    // Predicated region
    $region26: #{tpu_custom_call.1} parent=1 // pred_check
      _
    $region27: #{tpu_custom_call.1} parent=1 // pred_check_branch
      %68 = sbr.rel (0) target = $region29
    $region28: #{tpu_custom_call.1} parent=1 // pred_region
      %69 = dma.done [#allocation6], 2688
    $region29: #{tpu_custom_call.1} parent=1 // pred_fallthru
      _
    // Predicated region
    $region30: #{tpu_custom_call.1} parent=1 // pred_check
      _
    $region31: #{tpu_custom_call.1} parent=1 // pred_check_branch
      %71 = sbr.rel (0) target = $region33
    $region32: #{tpu_custom_call.1} parent=1 // pred_region
      %72 = dma.done [#allocation9], 25600
    $region33: #{tpu_custom_call.1} parent=1 // pred_fallthru
      _
    // Predicated region
    $region34: #{tpu_custom_call.1} parent=1 // pred_check
      _
    $region35: #{tpu_custom_call.1} parent=1 // pred_check_branch
      %74 = sbr.rel (0) target = $region37
    $region36: #{tpu_custom_call.1} parent=1 // pred_region
      %75 = dma.done [#allocation9], 8064
    $region37: #{tpu_custom_call.1} parent=1 // pred_fallthru
      _
    %s76 = sadd.s32 0, 0
    %s77 = smul.u32 6, %s76
    %s78 = sadd.s32 0, 0
    %p80 = scmp.eq.s32.totalorder 0, 0
    // Predicated region
    $region38: #{tpu_custom_call.1} parent=1 // pred_check
      %p81 = pneg %p80
    $region39: #{tpu_custom_call.1} parent=1 // pred_check_branch
      %83 = sbr.rel (%p81) target = $region41
    $region40: #{tpu_custom_call.1} parent=1 // pred_region
      %vm84 = vcmask 0
      %85 = vst.msk [vmem:[#allocation2] sm:$0x1] %vm84, -1e+30
      %86 = vst.msk [vmem:[#allocation3] sm:$0x1] %vm84, 0.0
      %v87 = vlaneseq
      %vm88 = vcmp.ge.s32.totalorder %v87, 0
      %vm89 = vcmp.lt.s32.totalorder %v87, 500
      %vm90 = vmand %vm88, %vm89
      %91 = vst.msk [vmem:[#allocation4] sm:$0xf] %vm90, 0.0
    $region41: #{tpu_custom_call.1} parent=1 // pred_fallthru
      _
    %v92 = vld [vmem:[#allocation5] sm:$0xff]
    %v93 = vld [vmem:[#allocation5 + $0x8] sm:$0xff]
    %v94 = vld [vmem:[#allocation5 + $0x10] sm:$0xff]
    %v95 = vld [vmem:[#allocation5 + $0x18] sm:$0xf]
    %v96 = vld [vmem:[#allocation5 + $0x1c] sm:$0xff]
    %v97 = vld [vmem:[#allocation5 + $0x24] sm:$0xff]
    %v98 = vld [vmem:[#allocation5 + $0x2c] sm:$0xff]
    %v99 = vld [vmem:[#allocation5 + $0x34] sm:$0xf]
    %v100 = vld [vmem:[#allocation5 + $0x38] sm:$0xff]
    %v101 = vld [vmem:[#allocation5 + $0x40] sm:$0xff]
    %v102 = vld [vmem:[#allocation5 + $0x48] sm:$0xff]
    %v103 = vld [vmem:[#allocation5 + $0x50] sm:$0xf]
    %v104 = vld [vmem:[#allocation5 + $0x54] sm:$0xff]
    %v105 = vld [vmem:[#allocation5 + $0x5c] sm:$0xff]
    %v106 = vld [vmem:[#allocation5 + $0x64] sm:$0xff]
    %v107 = vld [vmem:[#allocation5 + $0x6c] sm:$0xf]
    %v108 = vld [vmem:[#allocation5 + $0x70] sm:$0xff]
    %v109 = vld [vmem:[#allocation5 + $0x78] sm:$0xff]
    %v110 = vld [vmem:[#allocation5 + $0x80] sm:$0xff]
    %v111 = vld [vmem:[#allocation5 + $0x88] sm:$0xf]
    %v112 = vld [vmem:[#allocation5 + $0x8c] sm:$0xff]
    %v113 = vld [vmem:[#allocation5 + $0x94] sm:$0xff]
    %v114 = vld [vmem:[#allocation5 + $0x9c] sm:$0xff]
    %v115 = vld [vmem:[#allocation5 + $0xa4] sm:$0xf]
    %v116 = vld [vmem:[#allocation8] sm:$0xff]
    %v117 = vld [vmem:[#allocation8 + $0x8] sm:$0xff]
    %v118 = vld [vmem:[#allocation8 + $0x10] sm:$0xff]
    %v119 = vld [vmem:[#allocation8 + $0x18] sm:$0xff]
    %v120 = vld [vmem:[#allocation8 + $0x20] sm:$0xff]
    %v121 = vld [vmem:[#allocation8 + $0x28] sm:$0xff]
    %v122 = vld [vmem:[#allocation8 + $0x30] sm:$0xff]
    %v123 = vld [vmem:[#allocation8 + $0x38] sm:$0xff]
    %v124 = vld [vmem:[#allocation8 + $0x40] sm:$0xff]
    %v125 = vld [vmem:[#allocation8 + $0x48] sm:$0xff]
    %v126 = vld [vmem:[#allocation8 + $0x50] sm:$0xff]
    %v127 = vld [vmem:[#allocation8 + $0x58] sm:$0xff]
    %v128 = vld [vmem:[#allocation8 + $0x60] sm:$0xff]
    %v129 = vld [vmem:[#allocation8 + $0x68] sm:$0xff]
    %v130 = vld [vmem:[#allocation8 + $0x70] sm:$0xff]
    %v131 = vld [vmem:[#allocation8 + $0x78] sm:$0xff]
    %v132 = vld [vmem:[#allocation8 + $0x80] sm:$0xff]
    %v133 = vld [vmem:[#allocation8 + $0x88] sm:$0xff]
    %v134 = vld [vmem:[#allocation8 + $0x90] sm:$0xff]
    %v135 = vld [vmem:[#allocation8 + $0x98] sm:$0xff]
    %v136 = vld [vmem:[#allocation8 + $0xa0] sm:$0xff]
    %v137 = vld [vmem:[#allocation8 + $0xa8] sm:$0xff]
    %v138 = vld [vmem:[#allocation8 + $0xb0] sm:$0xff]
    %v139 = vld [vmem:[#allocation8 + $0xb8] sm:$0xff]
    %v140 = vld [vmem:[#allocation8 + $0xc0] sm:$0xff]
    %v141 = vld [vmem:[#allocation8 + $0xc8] sm:$0xff]
    %v142 = vld [vmem:[#allocation8 + $0xd0] sm:$0xff]
    %v143 = vld [vmem:[#allocation8 + $0xd8] sm:$0xff]
    %v144 = vld [vmem:[#allocation8 + $0xe0] sm:$0xff]
    %v145 = vld [vmem:[#allocation8 + $0xe8] sm:$0xff]
    %v146 = vld [vmem:[#allocation8 + $0xf0] sm:$0xff]
    %v147 = vld [vmem:[#allocation8 + $0xf8] sm:$0xff]
    %v148 = vld [vmem:[#allocation8 + $0x100] sm:$0xff]
    %v149 = vld [vmem:[#allocation8 + $0x108] sm:$0xff]
    %v150 = vld [vmem:[#allocation8 + $0x110] sm:$0xff]
    %v151 = vld [vmem:[#allocation8 + $0x118] sm:$0xff]
    %v152 = vld [vmem:[#allocation8 + $0x120] sm:$0xff]
    %v153 = vld [vmem:[#allocation8 + $0x128] sm:$0xff]
    %v154 = vld [vmem:[#allocation8 + $0x130] sm:$0xff]
    %v155 = vld [vmem:[#allocation8 + $0x138] sm:$0xff]
    %v156 = vld [vmem:[#allocation8 + $0x140] sm:$0xff]
    %v157 = vld [vmem:[#allocation8 + $0x148] sm:$0xff]
    %v158 = vld [vmem:[#allocation8 + $0x150] sm:$0xff]
    %v159 = vld [vmem:[#allocation8 + $0x158] sm:$0xff]
    %v160 = vld [vmem:[#allocation8 + $0x160] sm:$0xff]
    %v161 = vld [vmem:[#allocation8 + $0x168] sm:$0xff]
    %v162 = vld [vmem:[#allocation8 + $0x170] sm:$0xff]
    %v163 = vld [vmem:[#allocation8 + $0x178] sm:$0xff]
    %v164 = vld [vmem:[#allocation8 + $0x180] sm:$0xff]
    %v165 = vld [vmem:[#allocation8 + $0x188] sm:$0xff]
    %v166 = vld [vmem:[#allocation8 + $0x190] sm:$0xff]
    %v167 = vld [vmem:[#allocation8 + $0x198] sm:$0xff]
    %v168 = vld [vmem:[#allocation8 + $0x1a0] sm:$0xff]
    %v169 = vld [vmem:[#allocation8 + $0x1a8] sm:$0xff]
    %v170 = vld [vmem:[#allocation8 + $0x1b0] sm:$0xff]
    %v171 = vld [vmem:[#allocation8 + $0x1b8] sm:$0xff]
    %v172 = vld [vmem:[#allocation8 + $0x1c0] sm:$0xff]
    %v173 = vld [vmem:[#allocation8 + $0x1c8] sm:$0xff]
    %v174 = vld [vmem:[#allocation8 + $0x1d0] sm:$0xff]
    %v175 = vld [vmem:[#allocation8 + $0x1d8] sm:$0xff]
    %v176 = vld [vmem:[#allocation8 + $0x1e0] sm:$0xff]
    %v177 = vld [vmem:[#allocation8 + $0x1e8] sm:$0xff]
    %v178 = vld [vmem:[#allocation8 + $0x1f0] sm:$0xff]
    %v179 = vld [vmem:[#allocation8 + $0x1f8] sm:$0xff]
    %v180 = vld [vmem:[#allocation8 + $0x200] sm:$0xff]
    %v181 = vld [vmem:[#allocation8 + $0x208] sm:$0xff]
    %v182 = vld [vmem:[#allocation8 + $0x210] sm:$0xff]
    %v183 = vld [vmem:[#allocation8 + $0x218] sm:$0xff]
    %v184 = vld [vmem:[#allocation8 + $0x220] sm:$0xff]
    %v185 = vld [vmem:[#allocation8 + $0x228] sm:$0xff]
    %v186 = vld [vmem:[#allocation8 + $0x230] sm:$0xff]
    %v187 = vld [vmem:[#allocation8 + $0x238] sm:$0xff]
    %v188 = vld [vmem:[#allocation8 + $0x240] sm:$0xff]
    %v189 = vld [vmem:[#allocation8 + $0x248] sm:$0xff]
    %v190 = vld [vmem:[#allocation8 + $0x250] sm:$0xff]
    %v191 = vld [vmem:[#allocation8 + $0x258] sm:$0xff]
    %v192 = vld [vmem:[#allocation8 + $0x260] sm:$0xff]
    %v193 = vld [vmem:[#allocation8 + $0x268] sm:$0xff]
    %v194 = vld [vmem:[#allocation8 + $0x270] sm:$0xff]
    %v195 = vld [vmem:[#allocation8 + $0x278] sm:$0xff]
    %v196 = vld [vmem:[#allocation8 + $0x280] sm:$0xff]
    %v197 = vld [vmem:[#allocation8 + $0x288] sm:$0xff]
    %v198 = vld [vmem:[#allocation8 + $0x290] sm:$0xff]
    %v199 = vld [vmem:[#allocation8 + $0x298] sm:$0xff]
    %v200 = vld [vmem:[#allocation8 + $0x2a0] sm:$0xff]
    %v201 = vld [vmem:[#allocation8 + $0x2a8] sm:$0xff]
    %v202 = vld [vmem:[#allocation8 + $0x2b0] sm:$0xff]
    %v203 = vld [vmem:[#allocation8 + $0x2b8] sm:$0xff]
    %v204 = vld [vmem:[#allocation8 + $0x2c0] sm:$0xff]
    %v205 = vld [vmem:[#allocation8 + $0x2c8] sm:$0xff]
    %v206 = vld [vmem:[#allocation8 + $0x2d0] sm:$0xff]
    %v207 = vld [vmem:[#allocation8 + $0x2d8] sm:$0xff]
    %v208 = vld [vmem:[#allocation8 + $0x2e0] sm:$0xff]
    %v209 = vld [vmem:[#allocation8 + $0x2e8] sm:$0xff]
    %v210 = vld [vmem:[#allocation8 + $0x2f0] sm:$0xff]
    %v211 = vld [vmem:[#allocation8 + $0x2f8] sm:$0xff]
    %v212 = vld [vmem:[#allocation8 + $0x300] sm:$0xff]
    %v213 = vld [vmem:[#allocation8 + $0x308] sm:$0xff]
    %v214 = vld [vmem:[#allocation8 + $0x310] sm:$0xff]
    %v215 = vld [vmem:[#allocation8 + $0x318] sm:$0xff]
    %v216 = vld [vmem:[#allocation8 + $0x320] sm:$0xff]
    %v217 = vld [vmem:[#allocation8 + $0x328] sm:$0xff]
    %v218 = vld [vmem:[#allocation8 + $0x330] sm:$0xff]
    %v219 = vld [vmem:[#allocation8 + $0x338] sm:$0xff]
    %v220 = vld [vmem:[#allocation8 + $0x340] sm:$0xff]
    %v221 = vld [vmem:[#allocation8 + $0x348] sm:$0xff]
    %v222 = vld [vmem:[#allocation8 + $0x350] sm:$0xff]
    %v223 = vld [vmem:[#allocation8 + $0x358] sm:$0xff]
    %v224 = vld [vmem:[#allocation8 + $0x360] sm:$0xff]
    %v225 = vld [vmem:[#allocation8 + $0x368] sm:$0xff]
    %v226 = vld [vmem:[#allocation8 + $0x370] sm:$0xff]
    %v227 = vld [vmem:[#allocation8 + $0x378] sm:$0xff]
    %v228 = vld [vmem:[#allocation8 + $0x380] sm:$0xff]
    %v229 = vld [vmem:[#allocation8 + $0x388] sm:$0xff]
    %v230 = vld [vmem:[#allocation8 + $0x390] sm:$0xff]
    %v231 = vld [vmem:[#allocation8 + $0x398] sm:$0xff]
    %v232 = vld [vmem:[#allocation8 + $0x3a0] sm:$0xff]
    %v233 = vld [vmem:[#allocation8 + $0x3a8] sm:$0xff]
    %v234 = vld [vmem:[#allocation8 + $0x3b0] sm:$0xff]
    %v235 = vld [vmem:[#allocation8 + $0x3b8] sm:$0xff]
    %v236 = vld [vmem:[#allocation8 + $0x3c0] sm:$0xff]
    %v237 = vld [vmem:[#allocation8 + $0x3c8] sm:$0xff]
    %v238 = vld [vmem:[#allocation8 + $0x3d0] sm:$0xff]
    %v239 = vld [vmem:[#allocation8 + $0x3d8] sm:$0xff]
    %v240 = vld [vmem:[#allocation8 + $0x3e0] sm:$0xff]
    %v241 = vld [vmem:[#allocation8 + $0x3e8] sm:$0xff]
    %v242 = vld [vmem:[#allocation8 + $0x3f0] sm:$0xff]
    %v243 = vld [vmem:[#allocation8 + $0x3f8] sm:$0xff]
    %v244 = vld [vmem:[#allocation8 + $0x400] sm:$0xff]
    %v245 = vld [vmem:[#allocation8 + $0x408] sm:$0xff]
    %v246 = vld [vmem:[#allocation8 + $0x410] sm:$0xff]
    %v247 = vld [vmem:[#allocation8 + $0x418] sm:$0xff]
    %v248 = vld [vmem:[#allocation8 + $0x420] sm:$0xff]
    %v249 = vld [vmem:[#allocation8 + $0x428] sm:$0xff]
    %v250 = vld [vmem:[#allocation8 + $0x430] sm:$0xff]
    %v251 = vld [vmem:[#allocation8 + $0x438] sm:$0xff]
    %v252 = vld [vmem:[#allocation8 + $0x440] sm:$0xff]
    %v253 = vld [vmem:[#allocation8 + $0x448] sm:$0xff]
    %v254 = vld [vmem:[#allocation8 + $0x450] sm:$0xff]
    %v255 = vld [vmem:[#allocation8 + $0x458] sm:$0xff]
    %v256 = vld [vmem:[#allocation8 + $0x460] sm:$0xff]
    %v257 = vld [vmem:[#allocation8 + $0x468] sm:$0xff]
    %v258 = vld [vmem:[#allocation8 + $0x470] sm:$0xff]
    %v259 = vld [vmem:[#allocation8 + $0x478] sm:$0xff]
    %v260 = vld [vmem:[#allocation8 + $0x480] sm:$0xff]
    %v261 = vld [vmem:[#allocation8 + $0x488] sm:$0xff]
    %v262 = vld [vmem:[#allocation8 + $0x490] sm:$0xff]
    %v263 = vld [vmem:[#allocation8 + $0x498] sm:$0xff]
    %v264 = vld [vmem:[#allocation8 + $0x4a0] sm:$0xff]
    %v265 = vld [vmem:[#allocation8 + $0x4a8] sm:$0xff]
    %v266 = vld [vmem:[#allocation8 + $0x4b0] sm:$0xff]
    %v267 = vld [vmem:[#allocation8 + $0x4b8] sm:$0xff]
    %v268 = vld [vmem:[#allocation8 + $0x4c0] sm:$0xff]
    %v269 = vld [vmem:[#allocation8 + $0x4c8] sm:$0xff]
    %v270 = vld [vmem:[#allocation8 + $0x4d0] sm:$0xff]
    %v271 = vld [vmem:[#allocation8 + $0x4d8] sm:$0xff]
    %v272 = vld [vmem:[#allocation8 + $0x4e0] sm:$0xff]
    %v273 = vld [vmem:[#allocation8 + $0x4e8] sm:$0xff]
    %v274 = vld [vmem:[#allocation8 + $0x4f0] sm:$0xff]
    %v275 = vld [vmem:[#allocation8 + $0x4f8] sm:$0xff]
    %v276 = vld [vmem:[#allocation8 + $0x500] sm:$0xff]
    %v277 = vld [vmem:[#allocation8 + $0x508] sm:$0xff]
    %v278 = vld [vmem:[#allocation8 + $0x510] sm:$0xff]
    %v279 = vld [vmem:[#allocation8 + $0x518] sm:$0xff]
    %v280 = vld [vmem:[#allocation8 + $0x520] sm:$0xff]
    %v281 = vld [vmem:[#allocation8 + $0x528] sm:$0xff]
    %v282 = vld [vmem:[#allocation8 + $0x530] sm:$0xff]
    %v283 = vld [vmem:[#allocation8 + $0x538] sm:$0xff]
    %v284 = vld [vmem:[#allocation8 + $0x540] sm:$0xff]
    %v285 = vld [vmem:[#allocation8 + $0x548] sm:$0xff]
    %v286 = vld [vmem:[#allocation8 + $0x550] sm:$0xff]
    %v287 = vld [vmem:[#allocation8 + $0x558] sm:$0xff]
    %v288 = vld [vmem:[#allocation8 + $0x560] sm:$0xff]
    %v289 = vld [vmem:[#allocation8 + $0x568] sm:$0xff]
    %v290 = vld [vmem:[#allocation8 + $0x570] sm:$0xff]
    %v291 = vld [vmem:[#allocation8 + $0x578] sm:$0xff]
    %v292 = vld [vmem:[#allocation8 + $0x580] sm:$0xff]
    %v293 = vld [vmem:[#allocation8 + $0x588] sm:$0xff]
    %v294 = vld [vmem:[#allocation8 + $0x590] sm:$0xff]
    %v295 = vld [vmem:[#allocation8 + $0x598] sm:$0xff]
    %v296 = vld [vmem:[#allocation8 + $0x5a0] sm:$0xff]
    %v297 = vld [vmem:[#allocation8 + $0x5a8] sm:$0xff]
    %v298 = vld [vmem:[#allocation8 + $0x5b0] sm:$0xff]
    %v299 = vld [vmem:[#allocation8 + $0x5b8] sm:$0xff]
    %v300 = vld [vmem:[#allocation8 + $0x5c0] sm:$0xff]
    %v301 = vld [vmem:[#allocation8 + $0x5c8] sm:$0xff]
    %v302 = vld [vmem:[#allocation8 + $0x5d0] sm:$0xff]
    %v303 = vld [vmem:[#allocation8 + $0x5d8] sm:$0xff]
    %v304 = vld [vmem:[#allocation8 + $0x5e0] sm:$0xff]
    %v305 = vld [vmem:[#allocation8 + $0x5e8] sm:$0xff]
    %v306 = vld [vmem:[#allocation8 + $0x5f0] sm:$0xff]
    %v307 = vld [vmem:[#allocation8 + $0x5f8] sm:$0xff]
    %v308 = vld [vmem:[#allocation8 + $0x600] sm:$0xff]
    %v309 = vld [vmem:[#allocation8 + $0x608] sm:$0xff]
    %v310 = vld [vmem:[#allocation8 + $0x610] sm:$0xff]
    %v311 = vld [vmem:[#allocation8 + $0x618] sm:$0xff]
    %v312 = vld [vmem:[#allocation8 + $0x620] sm:$0xff]
    %v313 = vld [vmem:[#allocation8 + $0x628] sm:$0xff]
    %v314 = vld [vmem:[#allocation8 + $0x630] sm:$0xff]
    %v315 = vld [vmem:[#allocation8 + $0x638] sm:$0xff]
    %v316 = vld [vmem:[%s2] sm:$0xf]
    %v318 = vlaneseq
    %v319 = vshrl.u32 %v318, 7
    %v320 = vsub.s32 0, %v319
    %v321 = vrot.slane %v316, %v320
    %v322 = vlaneseq
    %v323 = vshrl.u32 %v322, 7
    %v324 = vsub.s32 1, %v323
    %v325 = vrot.slane %v316, %v324
    %v326 = vlaneseq
    %v327 = vshrl.u32 %v326, 7
    %v328 = vsub.s32 2, %v327
    %v329 = vrot.slane %v316, %v328
    %v330 = vlaneseq
    %v331 = vshrl.u32 %v330, 7
    %v332 = vsub.s32 3, %v331
    %v333 = vrot.slane %v316, %v332
    %v362 = vunpack.c.l.b16 %v92
    %v363 = vunpack.c.h.b16 %v92
    %v364 = vunpack.c.l.b16 %v93
    %v365 = vunpack.c.h.b16 %v93
    %v366 = vunpack.c.l.b16 %v94
    %v367 = vunpack.c.h.b16 %v94
    %v368 = vunpack.c.l.b16 %v95
    %v369 = vunpack.c.l.b16 %v96
    %v370 = vunpack.c.h.b16 %v96
    %v371 = vunpack.c.l.b16 %v97
    %v372 = vunpack.c.h.b16 %v97
    %v373 = vunpack.c.l.b16 %v98
    %v374 = vunpack.c.h.b16 %v98
    %v375 = vunpack.c.l.b16 %v99
    %v376 = vunpack.c.l.b16 %v100
    %v377 = vunpack.c.h.b16 %v100
    %v378 = vunpack.c.l.b16 %v101
    %v379 = vunpack.c.h.b16 %v101
    %v380 = vunpack.c.l.b16 %v102
    %v381 = vunpack.c.h.b16 %v102
    %v382 = vunpack.c.l.b16 %v103
    %v383 = vunpack.c.l.b16 %v104
    %v384 = vunpack.c.h.b16 %v104
    %v385 = vunpack.c.l.b16 %v105
    %v386 = vunpack.c.h.b16 %v105
    %v387 = vunpack.c.l.b16 %v106
    %v388 = vunpack.c.h.b16 %v106
    %v389 = vunpack.c.l.b16 %v107
    %v390 = vunpack.c.l.b16 %v108
    %v391 = vunpack.c.h.b16 %v108
    %v392 = vunpack.c.l.b16 %v109
    %v393 = vunpack.c.h.b16 %v109
    %v394 = vunpack.c.l.b16 %v110
    %v395 = vunpack.c.h.b16 %v110
    %v396 = vunpack.c.l.b16 %v111
    %v397 = vunpack.c.l.b16 %v112
    %v398 = vunpack.c.h.b16 %v112
    %v399 = vunpack.c.l.b16 %v113
    %v400 = vunpack.c.h.b16 %v113
    %v401 = vunpack.c.l.b16 %v114
    %v402 = vunpack.c.h.b16 %v114
    %v403 = vunpack.c.l.b16 %v115
    %v404 = vpack.c.b16 %v369, %v362
    %v405 = vpack.c.b16 %v370, %v363
    %v406 = vpack.c.b16 %v371, %v364
    %v407 = vpack.c.b16 %v372, %v365
    %v408 = vpack.c.b16 %v373, %v366
    %v409 = vpack.c.b16 %v374, %v367
    %v410 = vpack.c.b16 %v375, %v368
    %v411 = vpack.c.b16 %v383, %v376
    %v412 = vpack.c.b16 %v384, %v377
    %v413 = vpack.c.b16 %v385, %v378
    %v414 = vpack.c.b16 %v386, %v379
    %v415 = vpack.c.b16 %v387, %v380
    %v416 = vpack.c.b16 %v388, %v381
    %v417 = vpack.c.b16 %v389, %v382
    %v418 = vpack.c.b16 %v397, %v390
    %v419 = vpack.c.b16 %v398, %v391
    %v420 = vpack.c.b16 %v399, %v392
    %v421 = vpack.c.b16 %v400, %v393
    %v422 = vpack.c.b16 %v401, %v394
    %v423 = vpack.c.b16 %v402, %v395
    %v424 = vpack.c.b16 %v403, %v396
    %v643 = vunpack.c.l.b16 %v116
    %v644 = vunpack.c.h.b16 %v116
    %v645 = vunpack.c.l.b16 %v117
    %v646 = vunpack.c.h.b16 %v117
    %v647 = vunpack.c.l.b16 %v118
    %v648 = vunpack.c.h.b16 %v118
    %v649 = vunpack.c.l.b16 %v119
    %v650 = vunpack.c.h.b16 %v119
    %v651 = vunpack.c.l.b16 %v120
    %v652 = vunpack.c.h.b16 %v120
    %v653 = vunpack.c.l.b16 %v121
    %v654 = vunpack.c.h.b16 %v121
    %v655 = vunpack.c.l.b16 %v122
    %v656 = vunpack.c.h.b16 %v122
    %v657 = vunpack.c.l.b16 %v123
    %v658 = vunpack.c.h.b16 %v123
    %v659 = vunpack.c.l.b16 %v124
    %v660 = vunpack.c.h.b16 %v124
    %v661 = vunpack.c.l.b16 %v125
    %v662 = vunpack.c.h.b16 %v125
    %v663 = vunpack.c.l.b16 %v126
    %v664 = vunpack.c.h.b16 %v126
    %v665 = vunpack.c.l.b16 %v127
    %v666 = vunpack.c.h.b16 %v127
    %v667 = vunpack.c.l.b16 %v128
    %v668 = vunpack.c.h.b16 %v128
    %v669 = vunpack.c.l.b16 %v129
    %v670 = vunpack.c.h.b16 %v129
    %v671 = vunpack.c.l.b16 %v130
    %v672 = vunpack.c.h.b16 %v130
    %v673 = vunpack.c.l.b16 %v131
    %v674 = vunpack.c.h.b16 %v131
    %v675 = vunpack.c.l.b16 %v132
    %v676 = vunpack.c.h.b16 %v132
    %v677 = vunpack.c.l.b16 %v133
    %v678 = vunpack.c.h.b16 %v133
    %v679 = vunpack.c.l.b16 %v134
    %v680 = vunpack.c.h.b16 %v134
    %v681 = vunpack.c.l.b16 %v135
    %v682 = vunpack.c.h.b16 %v135
    %v683 = vunpack.c.l.b16 %v136
    %v684 = vunpack.c.h.b16 %v136
    %v685 = vunpack.c.l.b16 %v137
    %v686 = vunpack.c.h.b16 %v137
    %v687 = vunpack.c.l.b16 %v138
    %v688 = vunpack.c.h.b16 %v138
    %v689 = vunpack.c.l.b16 %v139
    %v690 = vunpack.c.h.b16 %v139
    %v691 = vunpack.c.l.b16 %v140
    %v692 = vunpack.c.h.b16 %v140
    %v693 = vunpack.c.l.b16 %v141
    %v694 = vunpack.c.h.b16 %v141
    %v695 = vunpack.c.l.b16 %v142
    %v696 = vunpack.c.h.b16 %v142
    %v697 = vunpack.c.l.b16 %v143
    %v698 = vunpack.c.h.b16 %v143
    %v699 = vunpack.c.l.b16 %v144
    %v700 = vunpack.c.h.b16 %v144
    %v701 = vunpack.c.l.b16 %v145
    %v702 = vunpack.c.h.b16 %v145
    %v703 = vunpack.c.l.b16 %v146
    %v704 = vunpack.c.h.b16 %v146
    %v705 = vunpack.c.l.b16 %v147
    %v706 = vunpack.c.h.b16 %v147
    %v707 = vunpack.c.l.b16 %v148
    %v708 = vunpack.c.h.b16 %v148
    %v709 = vunpack.c.l.b16 %v149
    %v710 = vunpack.c.h.b16 %v149
    %v711 = vunpack.c.l.b16 %v150
    %v712 = vunpack.c.h.b16 %v150
    %v713 = vunpack.c.l.b16 %v151
    %v714 = vunpack.c.h.b16 %v151
    %v715 = vunpack.c.l.b16 %v152
    %v716 = vunpack.c.h.b16 %v152
    %v717 = vunpack.c.l.b16 %v153
    %v718 = vunpack.c.h.b16 %v153
    %v719 = vunpack.c.l.b16 %v154
    %v720 = vunpack.c.h.b16 %v154
    %v721 = vunpack.c.l.b16 %v155
    %v722 = vunpack.c.h.b16 %v155
    %v723 = vunpack.c.l.b16 %v156
    %v724 = vunpack.c.h.b16 %v156
    %v725 = vunpack.c.l.b16 %v157
    %v726 = vunpack.c.h.b16 %v157
    %v727 = vunpack.c.l.b16 %v158
    %v728 = vunpack.c.h.b16 %v158
    %v729 = vunpack.c.l.b16 %v159
    %v730 = vunpack.c.h.b16 %v159
    %v731 = vunpack.c.l.b16 %v160
    %v732 = vunpack.c.h.b16 %v160
    %v733 = vunpack.c.l.b16 %v161
    %v734 = vunpack.c.h.b16 %v161
    %v735 = vunpack.c.l.b16 %v162
    %v736 = vunpack.c.h.b16 %v162
    %v737 = vunpack.c.l.b16 %v163
    %v738 = vunpack.c.h.b16 %v163
    %v739 = vunpack.c.l.b16 %v164
    %v740 = vunpack.c.h.b16 %v164
    %v741 = vunpack.c.l.b16 %v165
    %v742 = vunpack.c.h.b16 %v165
    %v743 = vunpack.c.l.b16 %v166
    %v744 = vunpack.c.h.b16 %v166
    %v745 = vunpack.c.l.b16 %v167
    %v746 = vunpack.c.h.b16 %v167
    %v747 = vunpack.c.l.b16 %v168
    %v748 = vunpack.c.h.b16 %v168
    %v749 = vunpack.c.l.b16 %v169
    %v750 = vunpack.c.h.b16 %v169
    %v751 = vunpack.c.l.b16 %v170
    %v752 = vunpack.c.h.b16 %v170
    %v753 = vunpack.c.l.b16 %v171
    %v754 = vunpack.c.h.b16 %v171
    %v755 = vunpack.c.l.b16 %v172
    %v756 = vunpack.c.h.b16 %v172
    %v757 = vunpack.c.l.b16 %v173
    %v758 = vunpack.c.h.b16 %v173
    %v759 = vunpack.c.l.b16 %v174
    %v760 = vunpack.c.h.b16 %v174
    %v761 = vunpack.c.l.b16 %v175
    %v762 = vunpack.c.h.b16 %v175
    %v763 = vunpack.c.l.b16 %v176
    %v764 = vunpack.c.h.b16 %v176
    %v765 = vunpack.c.l.b16 %v177
    %v766 = vunpack.c.h.b16 %v177
    %v767 = vunpack.c.l.b16 %v178
    %v768 = vunpack.c.h.b16 %v178
    %v769 = vunpack.c.l.b16 %v179
    %v770 = vunpack.c.h.b16 %v179
    %v771 = vunpack.c.l.b16 %v180
    %v772 = vunpack.c.h.b16 %v180
    %v773 = vunpack.c.l.b16 %v181
    %v774 = vunpack.c.h.b16 %v181
    %v775 = vunpack.c.l.b16 %v182
    %v776 = vunpack.c.h.b16 %v182
    %v777 = vunpack.c.l.b16 %v183
    %v778 = vunpack.c.h.b16 %v183
    %v779 = vunpack.c.l.b16 %v184
    %v780 = vunpack.c.h.b16 %v184
    %v781 = vunpack.c.l.b16 %v185
    %v782 = vunpack.c.h.b16 %v185
    %v783 = vunpack.c.l.b16 %v186
    %v784 = vunpack.c.h.b16 %v186
    %v785 = vunpack.c.l.b16 %v187
    %v786 = vunpack.c.h.b16 %v187
    %v787 = vunpack.c.l.b16 %v188
    %v788 = vunpack.c.h.b16 %v188
    %v789 = vunpack.c.l.b16 %v189
    %v790 = vunpack.c.h.b16 %v189
    %v791 = vunpack.c.l.b16 %v190
    %v792 = vunpack.c.h.b16 %v190
    %v793 = vunpack.c.l.b16 %v191
    %v794 = vunpack.c.h.b16 %v191
    %v795 = vunpack.c.l.b16 %v192
    %v796 = vunpack.c.h.b16 %v192
    %v797 = vunpack.c.l.b16 %v193
    %v798 = vunpack.c.h.b16 %v193
    %v799 = vunpack.c.l.b16 %v194
    %v800 = vunpack.c.h.b16 %v194
    %v801 = vunpack.c.l.b16 %v195
    %v802 = vunpack.c.h.b16 %v195
    %v803 = vunpack.c.l.b16 %v196
    %v804 = vunpack.c.h.b16 %v196
    %v805 = vunpack.c.l.b16 %v197
    %v806 = vunpack.c.h.b16 %v197
    %v807 = vunpack.c.l.b16 %v198
    %v808 = vunpack.c.h.b16 %v198
    %v809 = vunpack.c.l.b16 %v199
    %v810 = vunpack.c.h.b16 %v199
    %v811 = vunpack.c.l.b16 %v200
    %v812 = vunpack.c.h.b16 %v200
    %v813 = vunpack.c.l.b16 %v201
    %v814 = vunpack.c.h.b16 %v201
    %v815 = vunpack.c.l.b16 %v202
    %v816 = vunpack.c.h.b16 %v202
    %v817 = vunpack.c.l.b16 %v203
    %v818 = vunpack.c.h.b16 %v203
    %v819 = vunpack.c.l.b16 %v204
    %v820 = vunpack.c.h.b16 %v204
    %v821 = vunpack.c.l.b16 %v205
    %v822 = vunpack.c.h.b16 %v205
    %v823 = vunpack.c.l.b16 %v206
    %v824 = vunpack.c.h.b16 %v206
    %v825 = vunpack.c.l.b16 %v207
    %v826 = vunpack.c.h.b16 %v207
    %v827 = vunpack.c.l.b16 %v208
    %v828 = vunpack.c.h.b16 %v208
    %v829 = vunpack.c.l.b16 %v209
    %v830 = vunpack.c.h.b16 %v209
    %v831 = vunpack.c.l.b16 %v210
    %v832 = vunpack.c.h.b16 %v210
    %v833 = vunpack.c.l.b16 %v211
    %v834 = vunpack.c.h.b16 %v211
    %v835 = vunpack.c.l.b16 %v212
    %v836 = vunpack.c.h.b16 %v212
    %v837 = vunpack.c.l.b16 %v213
    %v838 = vunpack.c.h.b16 %v213
    %v839 = vunpack.c.l.b16 %v214
    %v840 = vunpack.c.h.b16 %v214
    %v841 = vunpack.c.l.b16 %v215
    %v842 = vunpack.c.h.b16 %v215
    %v843 = vunpack.c.l.b16 %v216
    %v844 = vunpack.c.h.b16 %v216
    %v845 = vunpack.c.l.b16 %v217
    %v846 = vunpack.c.h.b16 %v217
    %v847 = vunpack.c.l.b16 %v218
    %v848 = vunpack.c.h.b16 %v218
    %v849 = vunpack.c.l.b16 %v219
    %v850 = vunpack.c.h.b16 %v219
    %v851 = vunpack.c.l.b16 %v220
    %v852 = vunpack.c.h.b16 %v220
    %v853 = vunpack.c.l.b16 %v221
    %v854 = vunpack.c.h.b16 %v221
    %v855 = vunpack.c.l.b16 %v222
    %v856 = vunpack.c.h.b16 %v222
    %v857 = vunpack.c.l.b16 %v223
    %v858 = vunpack.c.h.b16 %v223
    %v859 = vunpack.c.l.b16 %v224
    %v860 = vunpack.c.h.b16 %v224
    %v861 = vunpack.c.l.b16 %v225
    %v862 = vunpack.c.h.b16 %v225
    %v863 = vunpack.c.l.b16 %v226
    %v864 = vunpack.c.h.b16 %v226
    %v865 = vunpack.c.l.b16 %v227
    %v866 = vunpack.c.h.b16 %v227
    %v867 = vunpack.c.l.b16 %v228
    %v868 = vunpack.c.h.b16 %v228
    %v869 = vunpack.c.l.b16 %v229
    %v870 = vunpack.c.h.b16 %v229
    %v871 = vunpack.c.l.b16 %v230
    %v872 = vunpack.c.h.b16 %v230
    %v873 = vunpack.c.l.b16 %v231
    %v874 = vunpack.c.h.b16 %v231
    %v875 = vunpack.c.l.b16 %v232
    %v876 = vunpack.c.h.b16 %v232
    %v877 = vunpack.c.l.b16 %v233
    %v878 = vunpack.c.h.b16 %v233
    %v879 = vunpack.c.l.b16 %v234
    %v880 = vunpack.c.h.b16 %v234
    %v881 = vunpack.c.l.b16 %v235
    %v882 = vunpack.c.h.b16 %v235
    %v883 = vunpack.c.l.b16 %v236
    %v884 = vunpack.c.h.b16 %v236
    %v885 = vunpack.c.l.b16 %v237
    %v886 = vunpack.c.h.b16 %v237
    %v887 = vunpack.c.l.b16 %v238
    %v888 = vunpack.c.h.b16 %v238
    %v889 = vunpack.c.l.b16 %v239
    %v890 = vunpack.c.h.b16 %v239
    %v891 = vunpack.c.l.b16 %v240
    %v892 = vunpack.c.h.b16 %v240
    %v893 = vunpack.c.l.b16 %v241
    %v894 = vunpack.c.h.b16 %v241
    %v895 = vunpack.c.l.b16 %v242
    %v896 = vunpack.c.h.b16 %v242
    %v897 = vunpack.c.l.b16 %v243
    %v898 = vunpack.c.h.b16 %v243
    %v899 = vunpack.c.l.b16 %v244
    %v900 = vunpack.c.h.b16 %v244
    %v901 = vunpack.c.l.b16 %v245
    %v902 = vunpack.c.h.b16 %v245
    %v903 = vunpack.c.l.b16 %v246
    %v904 = vunpack.c.h.b16 %v246
    %v905 = vunpack.c.l.b16 %v247
    %v906 = vunpack.c.h.b16 %v247
    %v907 = vunpack.c.l.b16 %v248
    %v908 = vunpack.c.h.b16 %v248
    %v909 = vunpack.c.l.b16 %v249
    %v910 = vunpack.c.h.b16 %v249
    %v911 = vunpack.c.l.b16 %v250
    %v912 = vunpack.c.h.b16 %v250
    %v913 = vunpack.c.l.b16 %v251
    %v914 = vunpack.c.h.b16 %v251
    %v915 = vunpack.c.l.b16 %v252
    %v916 = vunpack.c.h.b16 %v252
    %v917 = vunpack.c.l.b16 %v253
    %v918 = vunpack.c.h.b16 %v253
    %v919 = vunpack.c.l.b16 %v254
    %v920 = vunpack.c.h.b16 %v254
    %v921 = vunpack.c.l.b16 %v255
    %v922 = vunpack.c.h.b16 %v255
    %v923 = vunpack.c.l.b16 %v256
    %v924 = vunpack.c.h.b16 %v256
    %v925 = vunpack.c.l.b16 %v257
    %v926 = vunpack.c.h.b16 %v257
    %v927 = vunpack.c.l.b16 %v258
    %v928 = vunpack.c.h.b16 %v258
    %v929 = vunpack.c.l.b16 %v259
    %v930 = vunpack.c.h.b16 %v259
    %v931 = vunpack.c.l.b16 %v260
    %v932 = vunpack.c.h.b16 %v260
    %v933 = vunpack.c.l.b16 %v261
    %v934 = vunpack.c.h.b16 %v261
    %v935 = vunpack.c.l.b16 %v262
    %v936 = vunpack.c.h.b16 %v262
    %v937 = vunpack.c.l.b16 %v263
    %v938 = vunpack.c.h.b16 %v263
    %v939 = vunpack.c.l.b16 %v264
    %v940 = vunpack.c.h.b16 %v264
    %v941 = vunpack.c.l.b16 %v265
    %v942 = vunpack.c.h.b16 %v265
    %v943 = vunpack.c.l.b16 %v266
    %v944 = vunpack.c.h.b16 %v266
    %v945 = vunpack.c.l.b16 %v267
    %v946 = vunpack.c.h.b16 %v267
    %v947 = vunpack.c.l.b16 %v268
    %v948 = vunpack.c.h.b16 %v268
    %v949 = vunpack.c.l.b16 %v269
    %v950 = vunpack.c.h.b16 %v269
    %v951 = vunpack.c.l.b16 %v270
    %v952 = vunpack.c.h.b16 %v270
    %v953 = vunpack.c.l.b16 %v271
    %v954 = vunpack.c.h.b16 %v271
    %v955 = vunpack.c.l.b16 %v272
    %v956 = vunpack.c.h.b16 %v272
    %v957 = vunpack.c.l.b16 %v273
    %v958 = vunpack.c.h.b16 %v273
    %v959 = vunpack.c.l.b16 %v274
    %v960 = vunpack.c.h.b16 %v274
    %v961 = vunpack.c.l.b16 %v275
    %v962 = vunpack.c.h.b16 %v275
    %v963 = vunpack.c.l.b16 %v276
    %v964 = vunpack.c.h.b16 %v276
    %v965 = vunpack.c.l.b16 %v277
    %v966 = vunpack.c.h.b16 %v277
    %v967 = vunpack.c.l.b16 %v278
    %v968 = vunpack.c.h.b16 %v278
    %v969 = vunpack.c.l.b16 %v279
    %v970 = vunpack.c.h.b16 %v279
    %v971 = vunpack.c.l.b16 %v280
    %v972 = vunpack.c.h.b16 %v280
    %v973 = vunpack.c.l.b16 %v281
    %v974 = vunpack.c.h.b16 %v281
    %v975 = vunpack.c.l.b16 %v282
    %v976 = vunpack.c.h.b16 %v282
    %v977 = vunpack.c.l.b16 %v283
    %v978 = vunpack.c.h.b16 %v283
    %v979 = vunpack.c.l.b16 %v284
    %v980 = vunpack.c.h.b16 %v284
    %v981 = vunpack.c.l.b16 %v285
    %v982 = vunpack.c.h.b16 %v285
    %v983 = vunpack.c.l.b16 %v286
    %v984 = vunpack.c.h.b16 %v286
    %v985 = vunpack.c.l.b16 %v287
    %v986 = vunpack.c.h.b16 %v287
    %v987 = vunpack.c.l.b16 %v288
    %v988 = vunpack.c.h.b16 %v288
    %v989 = vunpack.c.l.b16 %v289
    %v990 = vunpack.c.h.b16 %v289
    %v991 = vunpack.c.l.b16 %v290
    %v992 = vunpack.c.h.b16 %v290
    %v993 = vunpack.c.l.b16 %v291
    %v994 = vunpack.c.h.b16 %v291
    %v995 = vunpack.c.l.b16 %v292
    %v996 = vunpack.c.h.b16 %v292
    %v997 = vunpack.c.l.b16 %v293
    %v998 = vunpack.c.h.b16 %v293
    %v999 = vunpack.c.l.b16 %v294
    %v1000 = vunpack.c.h.b16 %v294
    %v1001 = vunpack.c.l.b16 %v295
    %v1002 = vunpack.c.h.b16 %v295
    %v1003 = vunpack.c.l.b16 %v296
    %v1004 = vunpack.c.h.b16 %v296
    %v1005 = vunpack.c.l.b16 %v297
    %v1006 = vunpack.c.h.b16 %v297
    %v1007 = vunpack.c.l.b16 %v298
    %v1008 = vunpack.c.h.b16 %v298
    %v1009 = vunpack.c.l.b16 %v299
    %v1010 = vunpack.c.h.b16 %v299
    %v1011 = vunpack.c.l.b16 %v300
    %v1012 = vunpack.c.h.b16 %v300
    %v1013 = vunpack.c.l.b16 %v301
    %v1014 = vunpack.c.h.b16 %v301
    %v1015 = vunpack.c.l.b16 %v302
    %v1016 = vunpack.c.h.b16 %v302
    %v1017 = vunpack.c.l.b16 %v303
    %v1018 = vunpack.c.h.b16 %v303
    %v1019 = vunpack.c.l.b16 %v304
    %v1020 = vunpack.c.h.b16 %v304
    %v1021 = vunpack.c.l.b16 %v305
    %v1022 = vunpack.c.h.b16 %v305
    %v1023 = vunpack.c.l.b16 %v306
    %v1024 = vunpack.c.h.b16 %v306
    %v1025 = vunpack.c.l.b16 %v307
    %v1026 = vunpack.c.h.b16 %v307
    %v1027 = vunpack.c.l.b16 %v308
    %v1028 = vunpack.c.h.b16 %v308
    %v1029 = vunpack.c.l.b16 %v309
    %v1030 = vunpack.c.h.b16 %v309
    %v1031 = vunpack.c.l.b16 %v310
    %v1032 = vunpack.c.h.b16 %v310
    %v1033 = vunpack.c.l.b16 %v311
    %v1034 = vunpack.c.h.b16 %v311
    %v1035 = vunpack.c.l.b16 %v312
    %v1036 = vunpack.c.h.b16 %v312
    %v1037 = vunpack.c.l.b16 %v313
    %v1038 = vunpack.c.h.b16 %v313
    %v1039 = vunpack.c.l.b16 %v314
    %v1040 = vunpack.c.h.b16 %v314
    %v1041 = vunpack.c.l.b16 %v315
    %v1042 = vunpack.c.h.b16 %v315
    %v1043 = vpack.c.b16 %v647, %v643
    %v1044 = vpack.c.b16 %v648, %v644
    %v1045 = vpack.c.b16 %v649, %v645
    %v1046 = vpack.c.b16 %v650, %v646
    %v1047 = vpack.c.b16 %v655, %v651
    %v1048 = vpack.c.b16 %v656, %v652
    %v1049 = vpack.c.b16 %v657, %v653
    %v1050 = vpack.c.b16 %v658, %v654
    %v1051 = vpack.c.b16 %v663, %v659
    %v1052 = vpack.c.b16 %v664, %v660
    %v1053 = vpack.c.b16 %v665, %v661
    %v1054 = vpack.c.b16 %v666, %v662
    %v1055 = vpack.c.b16 %v671, %v667
    %v1056 = vpack.c.b16 %v672, %v668
    %v1057 = vpack.c.b16 %v673, %v669
    %v1058 = vpack.c.b16 %v674, %v670
    %v1059 = vpack.c.b16 %v679, %v675
    %v1060 = vpack.c.b16 %v680, %v676
    %v1061 = vpack.c.b16 %v681, %v677
    %v1062 = vpack.c.b16 %v682, %v678
    %v1063 = vpack.c.b16 %v687, %v683
    %v1064 = vpack.c.b16 %v688, %v684
    %v1065 = vpack.c.b16 %v689, %v685
    %v1066 = vpack.c.b16 %v690, %v686
    %v1067 = vpack.c.b16 %v695, %v691
    %v1068 = vpack.c.b16 %v696, %v692
    %v1069 = vpack.c.b16 %v697, %v693
    %v1070 = vpack.c.b16 %v698, %v694
    %v1071 = vpack.c.b16 %v703, %v699
    %v1072 = vpack.c.b16 %v704, %v700
    %v1073 = vpack.c.b16 %v705, %v701
    %v1074 = vpack.c.b16 %v706, %v702
    %v1075 = vpack.c.b16 %v711, %v707
    %v1076 = vpack.c.b16 %v712, %v708
    %v1077 = vpack.c.b16 %v713, %v709
    %v1078 = vpack.c.b16 %v714, %v710
    %v1079 = vpack.c.b16 %v719, %v715
    %v1080 = vpack.c.b16 %v720, %v716
    %v1081 = vpack.c.b16 %v721, %v717
    %v1082 = vpack.c.b16 %v722, %v718
    %v1083 = vpack.c.b16 %v727, %v723
    %v1084 = vpack.c.b16 %v728, %v724
    %v1085 = vpack.c.b16 %v729, %v725
    %v1086 = vpack.c.b16 %v730, %v726
    %v1087 = vpack.c.b16 %v735, %v731
    %v1088 = vpack.c.b16 %v736, %v732
    %v1089 = vpack.c.b16 %v737, %v733
    %v1090 = vpack.c.b16 %v738, %v734
    %v1091 = vpack.c.b16 %v743, %v739
    %v1092 = vpack.c.b16 %v744, %v740
    %v1093 = vpack.c.b16 %v745, %v741
    %v1094 = vpack.c.b16 %v746, %v742
    %v1095 = vpack.c.b16 %v751, %v747
    %v1096 = vpack.c.b16 %v752, %v748
    %v1097 = vpack.c.b16 %v753, %v749
    %v1098 = vpack.c.b16 %v754, %v750
    %v1099 = vpack.c.b16 %v759, %v755
    %v1100 = vpack.c.b16 %v760, %v756
    %v1101 = vpack.c.b16 %v761, %v757
    %v1102 = vpack.c.b16 %v762, %v758
    %v1103 = vpack.c.b16 %v767, %v763
    %v1104 = vpack.c.b16 %v768, %v764
    %v1105 = vpack.c.b16 %v769, %v765
    %v1106 = vpack.c.b16 %v770, %v766
    %v1107 = vpack.c.b16 %v775, %v771
    %v1108 = vpack.c.b16 %v776, %v772
    %v1109 = vpack.c.b16 %v777, %v773
    %v1110 = vpack.c.b16 %v778, %v774
    %v1111 = vpack.c.b16 %v783, %v779
    %v1112 = vpack.c.b16 %v784, %v780
    %v1113 = vpack.c.b16 %v785, %v781
    %v1114 = vpack.c.b16 %v786, %v782
    %v1115 = vpack.c.b16 %v791, %v787
    %v1116 = vpack.c.b16 %v792, %v788
    %v1117 = vpack.c.b16 %v793, %v789
    %v1118 = vpack.c.b16 %v794, %v790
    %v1119 = vpack.c.b16 %v799, %v795
    %v1120 = vpack.c.b16 %v800, %v796
    %v1121 = vpack.c.b16 %v801, %v797
    %v1122 = vpack.c.b16 %v802, %v798
    %v1123 = vpack.c.b16 %v807, %v803
    %v1124 = vpack.c.b16 %v808, %v804
    %v1125 = vpack.c.b16 %v809, %v805
    %v1126 = vpack.c.b16 %v810, %v806
    %v1127 = vpack.c.b16 %v815, %v811
    %v1128 = vpack.c.b16 %v816, %v812
    %v1129 = vpack.c.b16 %v817, %v813
    %v1130 = vpack.c.b16 %v818, %v814
    %v1131 = vpack.c.b16 %v823, %v819
    %v1132 = vpack.c.b16 %v824, %v820
    %v1133 = vpack.c.b16 %v825, %v821
    %v1134 = vpack.c.b16 %v826, %v822
    %v1135 = vpack.c.b16 %v831, %v827
    %v1136 = vpack.c.b16 %v832, %v828
    %v1137 = vpack.c.b16 %v833, %v829
    %v1138 = vpack.c.b16 %v834, %v830
    %v1139 = vpack.c.b16 %v839, %v835
    %v1140 = vpack.c.b16 %v840, %v836
    %v1141 = vpack.c.b16 %v841, %v837
    %v1142 = vpack.c.b16 %v842, %v838
    %v1143 = vpack.c.b16 %v847, %v843
    %v1144 = vpack.c.b16 %v848, %v844
    %v1145 = vpack.c.b16 %v849, %v845
    %v1146 = vpack.c.b16 %v850, %v846
    %v1147 = vpack.c.b16 %v855, %v851
    %v1148 = vpack.c.b16 %v856, %v852
    %v1149 = vpack.c.b16 %v857, %v853
    %v1150 = vpack.c.b16 %v858, %v854
    %v1151 = vpack.c.b16 %v863, %v859
    %v1152 = vpack.c.b16 %v864, %v860
    %v1153 = vpack.c.b16 %v865, %v861
    %v1154 = vpack.c.b16 %v866, %v862
    %v1155 = vpack.c.b16 %v871, %v867
    %v1156 = vpack.c.b16 %v872, %v868
    %v1157 = vpack.c.b16 %v873, %v869
    %v1158 = vpack.c.b16 %v874, %v870
    %v1159 = vpack.c.b16 %v879, %v875
    %v1160 = vpack.c.b16 %v880, %v876
    %v1161 = vpack.c.b16 %v881, %v877
    %v1162 = vpack.c.b16 %v882, %v878
    %v1163 = vpack.c.b16 %v887, %v883
    %v1164 = vpack.c.b16 %v888, %v884
    %v1165 = vpack.c.b16 %v889, %v885
    %v1166 = vpack.c.b16 %v890, %v886
    %v1167 = vpack.c.b16 %v895, %v891
    %v1168 = vpack.c.b16 %v896, %v892
    %v1169 = vpack.c.b16 %v897, %v893
    %v1170 = vpack.c.b16 %v898, %v894
    %v1171 = vpack.c.b16 %v903, %v899
    %v1172 = vpack.c.b16 %v904, %v900
    %v1173 = vpack.c.b16 %v905, %v901
    %v1174 = vpack.c.b16 %v906, %v902
    %v1175 = vpack.c.b16 %v911, %v907
    %v1176 = vpack.c.b16 %v912, %v908
    %v1177 = vpack.c.b16 %v913, %v909
    %v1178 = vpack.c.b16 %v914, %v910
    %v1179 = vpack.c.b16 %v919, %v915
    %v1180 = vpack.c.b16 %v920, %v916
    %v1181 = vpack.c.b16 %v921, %v917
    %v1182 = vpack.c.b16 %v922, %v918
    %v1183 = vpack.c.b16 %v927, %v923
    %v1184 = vpack.c.b16 %v928, %v924
    %v1185 = vpack.c.b16 %v929, %v925
    %v1186 = vpack.c.b16 %v930, %v926
    %v1187 = vpack.c.b16 %v935, %v931
    %v1188 = vpack.c.b16 %v936, %v932
    %v1189 = vpack.c.b16 %v937, %v933
    %v1190 = vpack.c.b16 %v938, %v934
    %v1191 = vpack.c.b16 %v943, %v939
    %v1192 = vpack.c.b16 %v944, %v940
    %v1193 = vpack.c.b16 %v945, %v941
    %v1194 = vpack.c.b16 %v946, %v942
    %v1195 = vpack.c.b16 %v951, %v947
    %v1196 = vpack.c.b16 %v952, %v948
    %v1197 = vpack.c.b16 %v953, %v949
    %v1198 = vpack.c.b16 %v954, %v950
    %v1199 = vpack.c.b16 %v959, %v955
    %v1200 = vpack.c.b16 %v960, %v956
    %v1201 = vpack.c.b16 %v961, %v957
    %v1202 = vpack.c.b16 %v962, %v958
    %v1203 = vpack.c.b16 %v967, %v963
    %v1204 = vpack.c.b16 %v968, %v964
    %v1205 = vpack.c.b16 %v969, %v965
    %v1206 = vpack.c.b16 %v970, %v966
    %v1207 = vpack.c.b16 %v975, %v971
    %v1208 = vpack.c.b16 %v976, %v972
    %v1209 = vpack.c.b16 %v977, %v973
    %v1210 = vpack.c.b16 %v978, %v974
    %v1211 = vpack.c.b16 %v983, %v979
    %v1212 = vpack.c.b16 %v984, %v980
    %v1213 = vpack.c.b16 %v985, %v981
    %v1214 = vpack.c.b16 %v986, %v982
    %v1215 = vpack.c.b16 %v991, %v987
    %v1216 = vpack.c.b16 %v992, %v988
    %v1217 = vpack.c.b16 %v993, %v989
    %v1218 = vpack.c.b16 %v994, %v990
    %v1219 = vpack.c.b16 %v999, %v995
    %v1220 = vpack.c.b16 %v1000, %v996
    %v1221 = vpack.c.b16 %v1001, %v997
    %v1222 = vpack.c.b16 %v1002, %v998
    %v1223 = vpack.c.b16 %v1007, %v1003
    %v1224 = vpack.c.b16 %v1008, %v1004
    %v1225 = vpack.c.b16 %v1009, %v1005
    %v1226 = vpack.c.b16 %v1010, %v1006
    %v1227 = vpack.c.b16 %v1015, %v1011
    %v1228 = vpack.c.b16 %v1016, %v1012
    %v1229 = vpack.c.b16 %v1017, %v1013
    %v1230 = vpack.c.b16 %v1018, %v1014
    %v1231 = vpack.c.b16 %v1023, %v1019
    %v1232 = vpack.c.b16 %v1024, %v1020
    %v1233 = vpack.c.b16 %v1025, %v1021
    %v1234 = vpack.c.b16 %v1026, %v1022
    %v1235 = vpack.c.b16 %v1031, %v1027
    %v1236 = vpack.c.b16 %v1032, %v1028
    %v1237 = vpack.c.b16 %v1033, %v1029
    %v1238 = vpack.c.b16 %v1034, %v1030
    %v1239 = vpack.c.b16 %v1039, %v1035
    %v1240 = vpack.c.b16 %v1040, %v1036
    %v1241 = vpack.c.b16 %v1041, %v1037
    %v1242 = vpack.c.b16 %v1042, %v1038
    %vm1443 = vcmask 261120
    %v1445 = vsel %vm1443, %v410, 0
    %v1448 = vsel %vm1443, %v417, 0
    %v1451 = vsel %vm1443, %v424, 0
    %1453 = vmatprep.subr.bf16.mxu0 %v1044
    %1454 = vmatpush1.bf16.msra.mxu0 %v1043
    %1455 = vmatprep.subr.bf16.mxu0 %v1048
    %1456 = vmatpush1.bf16.msra.mxu0 %v1047
    %1457 = vmatprep.subr.bf16.mxu0 %v1052
    %1458 = vmatpush1.bf16.msra.mxu0 %v1051
    %1459 = vmatprep.subr.bf16.mxu0 %v1056
    %1460 = vmatpush1.bf16.msra.mxu0 %v1055
    %1461 = vmatprep.subr.bf16.mxu0 %v1060
    %1462 = vmatpush1.bf16.msra.mxu0 %v1059
    %1463 = vmatprep.subr.bf16.mxu0 %v1064
    %1464 = vmatpush1.bf16.msra.mxu0 %v1063
    %1465 = vmatprep.subr.bf16.mxu0 %v1068
    %1466 = vmatpush1.bf16.msra.mxu0 %v1067
    %1467 = vmatprep.subr.bf16.mxu0 %v1072
    %1468 = vmatpush1.bf16.msra.mxu0 %v1071
    %1469 = vmatprep.subr.bf16.mxu0 %v1076
    %1470 = vmatpush1.bf16.msra.mxu0 %v1075
    %1471 = vmatprep.subr.bf16.mxu0 %v1080
    %1472 = vmatpush1.bf16.msra.mxu0 %v1079
    %1473 = vmatprep.subr.bf16.mxu0 %v1084
    %1474 = vmatpush1.bf16.msra.mxu0 %v1083
    %1475 = vmatprep.subr.bf16.mxu0 %v1088
    %1476 = vmatpush1.bf16.msra.mxu0 %v1087
    %1477 = vmatprep.subr.bf16.mxu0 %v1092
    %1478 = vmatpush1.bf16.msra.mxu0 %v1091
    %1479 = vmatprep.subr.bf16.mxu0 %v1096
    %1480 = vmatpush1.bf16.msra.mxu0 %v1095
    %1481 = vmatprep.subr.bf16.mxu0 %v1100
    %1482 = vmatpush1.bf16.msra.mxu0 %v1099
    %1483 = vmatprep.subr.bf16.mxu0 %v1104
    %1484 = vmatpush1.bf16.msra.mxu0 %v1103
    %1485 = vmatprep.mubr.bf16.mxu0 %v405
    %1486 = vmatmul.mubr.bf16.gmra.mrb[0].mxu0 %v404
    %v1487 = vpop.f32.mrb[0].mxu0
    %v1488 = vadd.f32 %v321, %v1487
    %v1489 = vpop.f32.mrb[0].mxu0
    %v1490 = vadd.f32 %v325, %v1489
    %v1491 = vpop.f32.mrb[0].mxu0
    %v1492 = vadd.f32 %v321, %v1491
    %v1493 = vpop.f32.mrb[0].mxu0
    %v1494 = vadd.f32 %v325, %v1493
    %1495 = vmatprep.mubr.bf16.mxu0 %v412
    %1496 = vmatmul.mubr.bf16.gmra.mrb[0].mxu0 %v411
    %v1497 = vpop.f32.mrb[0].mxu0
    %v1498 = vadd.f32 %v321, %v1497
    %v1499 = vpop.f32.mrb[0].mxu0
    %v1500 = vadd.f32 %v325, %v1499
    %v1501 = vpop.f32.mrb[0].mxu0
    %v1502 = vadd.f32 %v321, %v1501
    %v1503 = vpop.f32.mrb[0].mxu0
    %v1504 = vadd.f32 %v325, %v1503
    %1505 = vmatprep.mubr.bf16.mxu0 %v419
    %1506 = vmatmul.mubr.bf16.gmra.mrb[0].mxu0 %v418
    %v1507 = vpop.f32.mrb[0].mxu0
    %v1508 = vadd.f32 %v321, %v1507
    %v1509 = vpop.f32.mrb[0].mxu0
    %v1510 = vadd.f32 %v325, %v1509
    %v1511 = vpop.f32.mrb[0].mxu0
    %v1512 = vadd.f32 %v321, %v1511
    %v1513 = vpop.f32.mrb[0].mxu0
    %v1514 = vadd.f32 %v325, %v1513
    %1515 = vdwg.mxu0
    %1516 = vmatprep.subr.bf16.mxu0 %v1108
    %1517 = vmatpush1.bf16.msra.mxu0 %v1107
    %1518 = vmatprep.subr.bf16.mxu0 %v1112
    %1519 = vmatpush1.bf16.msra.mxu0 %v1111
    %1520 = vmatprep.subr.bf16.mxu0 %v1116
    %1521 = vmatpush1.bf16.msra.mxu0 %v1115
    %1522 = vmatprep.subr.bf16.mxu0 %v1120
    %1523 = vmatpush1.bf16.msra.mxu0 %v1119
    %1524 = vmatprep.subr.bf16.mxu0 %v1124
    %1525 = vmatpush1.bf16.msra.mxu0 %v1123
    %1526 = vmatprep.subr.bf16.mxu0 %v1128
    %1527 = vmatpush1.bf16.msra.mxu0 %v1127
    %1528 = vmatprep.subr.bf16.mxu0 %v1132
    %1529 = vmatpush1.bf16.msra.mxu0 %v1131
    %1530 = vmatprep.subr.bf16.mxu0 %v1136
    %1531 = vmatpush1.bf16.msra.mxu0 %v1135
    %1532 = vmatprep.subr.bf16.mxu0 %v1140
    %1533 = vmatpush1.bf16.msra.mxu0 %v1139
    %1534 = vmatprep.subr.bf16.mxu0 %v1144
    %1535 = vmatpush1.bf16.msra.mxu0 %v1143
    %1536 = vmatprep.subr.bf16.mxu0 %v1148
    %1537 = vmatpush1.bf16.msra.mxu0 %v1147
    %1538 = vmatprep.subr.bf16.mxu0 %v1152
    %1539 = vmatpush1.bf16.msra.mxu0 %v1151
    %1540 = vmatprep.subr.bf16.mxu0 %v1156
    %1541 = vmatpush1.bf16.msra.mxu0 %v1155
    %1542 = vmatprep.subr.bf16.mxu0 %v1160
    %1543 = vmatpush1.bf16.msra.mxu0 %v1159
    %1544 = vmatprep.subr.bf16.mxu0 %v1164
    %1545 = vmatpush1.bf16.msra.mxu0 %v1163
    %1546 = vmatprep.subr.bf16.mxu0 %v1168
    %1547 = vmatpush1.bf16.msra.mxu0 %v1167
    %1548 = vmatprep.mubr.bf16.mxu0 %v407
    %1549 = vmatmul.mubr.bf16.gmra.mrb[0].mxu0 %v406
    %v1550 = vpop.f32.mrb[0].mxu0
    %v1551 = vadd.f32 %v1488, %v1550
    %v1552 = vpop.f32.mrb[0].mxu0
    %v1553 = vadd.f32 %v1490, %v1552
    %v1554 = vpop.f32.mrb[0].mxu0
    %v1555 = vadd.f32 %v1492, %v1554
    %v1556 = vpop.f32.mrb[0].mxu0
    %v1557 = vadd.f32 %v1494, %v1556
    %1558 = vmatprep.mubr.bf16.mxu0 %v414
    %1559 = vmatmul.mubr.bf16.gmra.mrb[0].mxu0 %v413
    %v1560 = vpop.f32.mrb[0].mxu0
    %v1561 = vadd.f32 %v1498, %v1560
    %v1562 = vpop.f32.mrb[0].mxu0
    %v1563 = vadd.f32 %v1500, %v1562
    %v1564 = vpop.f32.mrb[0].mxu0
    %v1565 = vadd.f32 %v1502, %v1564
    %v1566 = vpop.f32.mrb[0].mxu0
    %v1567 = vadd.f32 %v1504, %v1566
    %1568 = vmatprep.mubr.bf16.mxu0 %v421
    %1569 = vmatmul.mubr.bf16.gmra.mrb[0].mxu0 %v420
    %v1570 = vpop.f32.mrb[0].mxu0
    %v1571 = vadd.f32 %v1508, %v1570
    %v1572 = vpop.f32.mrb[0].mxu0
    %v1573 = vadd.f32 %v1510, %v1572
    %v1574 = vpop.f32.mrb[0].mxu0
    %v1575 = vadd.f32 %v1512, %v1574
    %v1576 = vpop.f32.mrb[0].mxu0
    %v1577 = vadd.f32 %v1514, %v1576
    %1578 = vdwg.mxu0
    %1579 = vmatprep.subr.bf16.mxu0 %v1172
    %1580 = vmatpush1.bf16.msra.mxu0 %v1171
    %1581 = vmatprep.subr.bf16.mxu0 %v1176
    %1582 = vmatpush1.bf16.msra.mxu0 %v1175
    %1583 = vmatprep.subr.bf16.mxu0 %v1180
    %1584 = vmatpush1.bf16.msra.mxu0 %v1179
    %1585 = vmatprep.subr.bf16.mxu0 %v1184
    %1586 = vmatpush1.bf16.msra.mxu0 %v1183
    %1587 = vmatprep.subr.bf16.mxu0 %v1188
    %1588 = vmatpush1.bf16.msra.mxu0 %v1187
    %1589 = vmatprep.subr.bf16.mxu0 %v1192
    %1590 = vmatpush1.bf16.msra.mxu0 %v1191
    %1591 = vmatprep.subr.bf16.mxu0 %v1196
    %1592 = vmatpush1.bf16.msra.mxu0 %v1195
    %1593 = vmatprep.subr.bf16.mxu0 %v1200
    %1594 = vmatpush1.bf16.msra.mxu0 %v1199
    %1595 = vmatprep.subr.bf16.mxu0 %v1204
    %1596 = vmatpush1.bf16.msra.mxu0 %v1203
    %1597 = vmatprep.subr.bf16.mxu0 %v1208
    %1598 = vmatpush1.bf16.msra.mxu0 %v1207
    %1599 = vmatprep.subr.bf16.mxu0 %v1212
    %1600 = vmatpush1.bf16.msra.mxu0 %v1211
    %1601 = vmatprep.subr.bf16.mxu0 %v1216
    %1602 = vmatpush1.bf16.msra.mxu0 %v1215
    %1603 = vmatprep.subr.bf16.mxu0 %v1220
    %1604 = vmatpush1.bf16.msra.mxu0 %v1219
    %1605 = vmatprep.subr.bf16.mxu0 %v1224
    %1606 = vmatpush1.bf16.msra.mxu0 %v1223
    %1607 = vmatprep.subr.bf16.mxu0 %v1228
    %1608 = vmatpush1.bf16.msra.mxu0 %v1227
    %1609 = vmatprep.subr.bf16.mxu0 %v1232
    %1610 = vmatpush1.bf16.msra.mxu0 %v1231
    %1611 = vmatprep.mubr.bf16.mxu0 %v409
    %1612 = vmatmul.mubr.bf16.gmra.mrb[0].mxu0 %v408
    %v1613 = vpop.f32.mrb[0].mxu0
    %v1614 = vadd.f32 %v1551, %v1613
    %v1615 = vpop.f32.mrb[0].mxu0
    %v1616 = vadd.f32 %v1553, %v1615
    %v1617 = vpop.f32.mrb[0].mxu0
    %v1618 = vadd.f32 %v1555, %v1617
    %v1619 = vpop.f32.mrb[0].mxu0
    %v1620 = vadd.f32 %v1557, %v1619
    %1621 = vmatprep.mubr.bf16.mxu0 %v416
    %1622 = vmatmul.mubr.bf16.gmra.mrb[0].mxu0 %v415
    %v1623 = vpop.f32.mrb[0].mxu0
    %v1624 = vadd.f32 %v1561, %v1623
    %v1625 = vpop.f32.mrb[0].mxu0
    %v1626 = vadd.f32 %v1563, %v1625
    %v1627 = vpop.f32.mrb[0].mxu0
    %v1628 = vadd.f32 %v1565, %v1627
    %v1629 = vpop.f32.mrb[0].mxu0
    %v1630 = vadd.f32 %v1567, %v1629
    %1631 = vmatprep.mubr.bf16.mxu0 %v423
    %1632 = vmatmul.mubr.bf16.gmra.mrb[0].mxu0 %v422
    %v1633 = vpop.f32.mrb[0].mxu0
    %v1634 = vadd.f32 %v1571, %v1633
    %v1635 = vpop.f32.mrb[0].mxu0
    %v1636 = vadd.f32 %v1573, %v1635
    %v1637 = vpop.f32.mrb[0].mxu0
    %v1638 = vadd.f32 %v1575, %v1637
    %v1639 = vpop.f32.mrb[0].mxu0
    %v1640 = vadd.f32 %v1577, %v1639
    %1641 = vdwg.mxu0
    %1642 = vmatprep.subr.bf16.mxu0 %v1236
    %1643 = vmatpush1.bf16.msra.mxu0 %v1235
    %1644 = vmatprep.subr.bf16.mxu0 %v1240
    %1645 = vmatpush1.bf16.msra.mxu0 %v1239
    %1646 = vmatprep.subr.bf16.mxu0 0
    %1647 = vmatpush1.bf16.msra.mxu0 0
    %1648 = vmatprep.subr.bf16.mxu0 0
    %1649 = vmatpush1.bf16.msra.mxu0 0
    %1650 = vmatprep.subr.bf16.mxu0 0
    %1651 = vmatpush1.bf16.msra.mxu0 0
    %1652 = vmatprep.subr.bf16.mxu0 0
    %1653 = vmatpush1.bf16.msra.mxu0 0
    %1654 = vmatprep.subr.bf16.mxu0 0
    %1655 = vmatpush1.bf16.msra.mxu0 0
    %1656 = vmatprep.subr.bf16.mxu0 0
    %1657 = vmatpush1.bf16.msra.mxu0 0
    %1658 = vmatprep.subr.bf16.mxu0 0
    %1659 = vmatpush1.bf16.msra.mxu0 0
    %1660 = vmatprep.subr.bf16.mxu0 0
    %1661 = vmatpush1.bf16.msra.mxu0 0
    %1662 = vmatprep.subr.bf16.mxu0 0
    %1663 = vmatpush1.bf16.msra.mxu0 0
    %1664 = vmatprep.subr.bf16.mxu0 0
    %1665 = vmatpush1.bf16.msra.mxu0 0
    %1666 = vmatprep.subr.bf16.mxu0 0
    %1667 = vmatpush1.bf16.msra.mxu0 0
    %1668 = vmatprep.subr.bf16.mxu0 0
    %1669 = vmatpush1.bf16.msra.mxu0 0
    %1670 = vmatprep.subr.bf16.mxu0 0
    %1671 = vmatpush1.bf16.msra.mxu0 0
    %1672 = vmatprep.subr.bf16.mxu0 0
    %1673 = vmatpush1.bf16.msra.mxu0 0
    %1674 = vmatprep.mubr.bf16.mxu0 0
    %1675 = vmatmul.mubr.bf16.gmra.mrb[0].mxu0 %v1445
    %v1676 = vpop.f32.mrb[0].mxu0
    %v1677 = vadd.f32 %v1614, %v1676
    %v1678 = vpop.f32.mrb[0].mxu0
    %v1679 = vadd.f32 %v1616, %v1678
    %v1680 = vpop.f32.mrb[0].mxu0
    %v1681 = vadd.f32 %v1618, %v1680
    %v1682 = vpop.f32.mrb[0].mxu0
    %v1683 = vadd.f32 %v1620, %v1682
    %1684 = vmatprep.mubr.bf16.mxu0 0
    %1685 = vmatmul.mubr.bf16.gmra.mrb[0].mxu0 %v1448
    %v1686 = vpop.f32.mrb[0].mxu0
    %v1687 = vadd.f32 %v1624, %v1686
    %v1688 = vpop.f32.mrb[0].mxu0
    %v1689 = vadd.f32 %v1626, %v1688
    %v1690 = vpop.f32.mrb[0].mxu0
    %v1691 = vadd.f32 %v1628, %v1690
    %v1692 = vpop.f32.mrb[0].mxu0
    %v1693 = vadd.f32 %v1630, %v1692
    %1694 = vmatprep.mubr.bf16.mxu0 0
    %1695 = vmatmul.mubr.bf16.gmra.mrb[0].mxu0 %v1451
    %v1696 = vpop.f32.mrb[0].mxu0
    %v1697 = vadd.f32 %v1634, %v1696
    %v1698 = vpop.f32.mrb[0].mxu0
    %v1699 = vadd.f32 %v1636, %v1698
    %v1700 = vpop.f32.mrb[0].mxu0
    %v1701 = vadd.f32 %v1638, %v1700
    %v1702 = vpop.f32.mrb[0].mxu0
    %v1703 = vadd.f32 %v1640, %v1702
    %1704 = vdwg.mxu0
    %1705 = vmatprep.subr.bf16.mxu0 %v1046
    %1706 = vmatpush1.bf16.msra.mxu0 %v1045
    %1707 = vmatprep.subr.bf16.mxu0 %v1050
    %1708 = vmatpush1.bf16.msra.mxu0 %v1049
    %1709 = vmatprep.subr.bf16.mxu0 %v1054
    %1710 = vmatpush1.bf16.msra.mxu0 %v1053
    %1711 = vmatprep.subr.bf16.mxu0 %v1058
    %1712 = vmatpush1.bf16.msra.mxu0 %v1057
    %1713 = vmatprep.subr.bf16.mxu0 %v1062
    %1714 = vmatpush1.bf16.msra.mxu0 %v1061
    %1715 = vmatprep.subr.bf16.mxu0 %v1066
    %1716 = vmatpush1.bf16.msra.mxu0 %v1065
    %1717 = vmatprep.subr.bf16.mxu0 %v1070
    %1718 = vmatpush1.bf16.msra.mxu0 %v1069
    %1719 = vmatprep.subr.bf16.mxu0 %v1074
    %1720 = vmatpush1.bf16.msra.mxu0 %v1073
    %1721 = vmatprep.subr.bf16.mxu0 %v1078
    %1722 = vmatpush1.bf16.msra.mxu0 %v1077
    %1723 = vmatprep.subr.bf16.mxu0 %v1082
    %1724 = vmatpush1.bf16.msra.mxu0 %v1081
    %1725 = vmatprep.subr.bf16.mxu0 %v1086
    %1726 = vmatpush1.bf16.msra.mxu0 %v1085
    %1727 = vmatprep.subr.bf16.mxu0 %v1090
    %1728 = vmatpush1.bf16.msra.mxu0 %v1089
    %1729 = vmatprep.subr.bf16.mxu0 %v1094
    %1730 = vmatpush1.bf16.msra.mxu0 %v1093
    %1731 = vmatprep.subr.bf16.mxu0 %v1098
    %1732 = vmatpush1.bf16.msra.mxu0 %v1097
    %1733 = vmatprep.subr.bf16.mxu0 %v1102
    %1734 = vmatpush1.bf16.msra.mxu0 %v1101
    %1735 = vmatprep.subr.bf16.mxu0 %v1106
    %1736 = vmatpush1.bf16.msra.mxu0 %v1105
    %1737 = vmatprep.mubr.bf16.mxu0 %v405
    %1738 = vmatmul.mubr.bf16.gmra.mrb[0].mxu0 %v404
    %v1739 = vpop.f32.mrb[0].mxu0
    %v1740 = vadd.f32 %v329, %v1739
    %v1741 = vpop.f32.mrb[0].mxu0
    %v1742 = vadd.f32 %v333, %v1741
    %v1743 = vpop.f32.mrb[0].mxu0
    %v1744 = vadd.f32 %v329, %v1743
    %v1745 = vpop.f32.mrb[0].mxu0
    %v1746 = vadd.f32 %v333, %v1745
    %1747 = vmatprep.mubr.bf16.mxu0 %v412
    %1748 = vmatmul.mubr.bf16.gmra.mrb[0].mxu0 %v411
    %v1749 = vpop.f32.mrb[0].mxu0
    %v1750 = vadd.f32 %v329, %v1749
    %v1751 = vpop.f32.mrb[0].mxu0
    %v1752 = vadd.f32 %v333, %v1751
    %v1753 = vpop.f32.mrb[0].mxu0
    %v1754 = vadd.f32 %v329, %v1753
    %v1755 = vpop.f32.mrb[0].mxu0
    %v1756 = vadd.f32 %v333, %v1755
    %1757 = vmatprep.mubr.bf16.mxu0 %v419
    %1758 = vmatmul.mubr.bf16.gmra.mrb[0].mxu0 %v418
    %v1759 = vpop.f32.mrb[0].mxu0
    %v1760 = vadd.f32 %v329, %v1759
    %v1761 = vpop.f32.mrb[0].mxu0
    %v1762 = vadd.f32 %v333, %v1761
    %v1763 = vpop.f32.mrb[0].mxu0
    %v1764 = vadd.f32 %v329, %v1763
    %v1765 = vpop.f32.mrb[0].mxu0
    %v1766 = vadd.f32 %v333, %v1765
    %1767 = vdwg.mxu0
    %1768 = vmatprep.subr.bf16.mxu0 %v1110
    %1769 = vmatpush1.bf16.msra.mxu0 %v1109
    %1770 = vmatprep.subr.bf16.mxu0 %v1114
    %1771 = vmatpush1.bf16.msra.mxu0 %v1113
    %1772 = vmatprep.subr.bf16.mxu0 %v1118
    %1773 = vmatpush1.bf16.msra.mxu0 %v1117
    %1774 = vmatprep.subr.bf16.mxu0 %v1122
    %1775 = vmatpush1.bf16.msra.mxu0 %v1121
    %1776 = vmatprep.subr.bf16.mxu0 %v1126
    %1777 = vmatpush1.bf16.msra.mxu0 %v1125
    %1778 = vmatprep.subr.bf16.mxu0 %v1130
    %1779 = vmatpush1.bf16.msra.mxu0 %v1129
    %1780 = vmatprep.subr.bf16.mxu0 %v1134
    %1781 = vmatpush1.bf16.msra.mxu0 %v1133
    %1782 = vmatprep.subr.bf16.mxu0 %v1138
    %1783 = vmatpush1.bf16.msra.mxu0 %v1137
    %1784 = vmatprep.subr.bf16.mxu0 %v1142
    %1785 = vmatpush1.bf16.msra.mxu0 %v1141
    %1786 = vmatprep.subr.bf16.mxu0 %v1146
    %1787 = vmatpush1.bf16.msra.mxu0 %v1145
    %1788 = vmatprep.subr.bf16.mxu0 %v1150
    %1789 = vmatpush1.bf16.msra.mxu0 %v1149
    %1790 = vmatprep.subr.bf16.mxu0 %v1154
    %1791 = vmatpush1.bf16.msra.mxu0 %v1153
    %1792 = vmatprep.subr.bf16.mxu0 %v1158
    %1793 = vmatpush1.bf16.msra.mxu0 %v1157
    %1794 = vmatprep.subr.bf16.mxu0 %v1162
    %1795 = vmatpush1.bf16.msra.mxu0 %v1161
    %1796 = vmatprep.subr.bf16.mxu0 %v1166
    %1797 = vmatpush1.bf16.msra.mxu0 %v1165
    %1798 = vmatprep.subr.bf16.mxu0 %v1170
    %1799 = vmatpush1.bf16.msra.mxu0 %v1169
    %1800 = vmatprep.mubr.bf16.mxu0 %v407
    %1801 = vmatmul.mubr.bf16.gmra.mrb[0].mxu0 %v406
    %v1802 = vpop.f32.mrb[0].mxu0
    %v1803 = vadd.f32 %v1740, %v1802
    %v1804 = vpop.f32.mrb[0].mxu0
    %v1805 = vadd.f32 %v1742, %v1804
    %v1806 = vpop.f32.mrb[0].mxu0
    %v1807 = vadd.f32 %v1744, %v1806
    %v1808 = vpop.f32.mrb[0].mxu0
    %v1809 = vadd.f32 %v1746, %v1808
    %1810 = vmatprep.mubr.bf16.mxu0 %v414
    %1811 = vmatmul.mubr.bf16.gmra.mrb[0].mxu0 %v413
    %v1812 = vpop.f32.mrb[0].mxu0
    %v1813 = vadd.f32 %v1750, %v1812
    %v1814 = vpop.f32.mrb[0].mxu0
    %v1815 = vadd.f32 %v1752, %v1814
    %v1816 = vpop.f32.mrb[0].mxu0
    %v1817 = vadd.f32 %v1754, %v1816
    %v1818 = vpop.f32.mrb[0].mxu0
    %v1819 = vadd.f32 %v1756, %v1818
    %1820 = vmatprep.mubr.bf16.mxu0 %v421
    %1821 = vmatmul.mubr.bf16.gmra.mrb[0].mxu0 %v420
    %v1822 = vpop.f32.mrb[0].mxu0
    %v1823 = vadd.f32 %v1760, %v1822
    %v1824 = vpop.f32.mrb[0].mxu0
    %v1825 = vadd.f32 %v1762, %v1824
    %v1826 = vpop.f32.mrb[0].mxu0
    %v1827 = vadd.f32 %v1764, %v1826
    %v1828 = vpop.f32.mrb[0].mxu0
    %v1829 = vadd.f32 %v1766, %v1828
    %1830 = vdwg.mxu0
    %1831 = vmatprep.subr.bf16.mxu0 %v1174
    %1832 = vmatpush1.bf16.msra.mxu0 %v1173
    %1833 = vmatprep.subr.bf16.mxu0 %v1178
    %1834 = vmatpush1.bf16.msra.mxu0 %v1177
    %1835 = vmatprep.subr.bf16.mxu0 %v1182
    %1836 = vmatpush1.bf16.msra.mxu0 %v1181
    %1837 = vmatprep.subr.bf16.mxu0 %v1186
    %1838 = vmatpush1.bf16.msra.mxu0 %v1185
    %1839 = vmatprep.subr.bf16.mxu0 %v1190
    %1840 = vmatpush1.bf16.msra.mxu0 %v1189
    %1841 = vmatprep.subr.bf16.mxu0 %v1194
    %1842 = vmatpush1.bf16.msra.mxu0 %v1193
    %1843 = vmatprep.subr.bf16.mxu0 %v1198
    %1844 = vmatpush1.bf16.msra.mxu0 %v1197
    %1845 = vmatprep.subr.bf16.mxu0 %v1202
    %1846 = vmatpush1.bf16.msra.mxu0 %v1201
    %1847 = vmatprep.subr.bf16.mxu0 %v1206
    %1848 = vmatpush1.bf16.msra.mxu0 %v1205
    %1849 = vmatprep.subr.bf16.mxu0 %v1210
    %1850 = vmatpush1.bf16.msra.mxu0 %v1209
    %1851 = vmatprep.subr.bf16.mxu0 %v1214
    %1852 = vmatpush1.bf16.msra.mxu0 %v1213
    %1853 = vmatprep.subr.bf16.mxu0 %v1218
    %1854 = vmatpush1.bf16.msra.mxu0 %v1217
    %1855 = vmatprep.subr.bf16.mxu0 %v1222
    %1856 = vmatpush1.bf16.msra.mxu0 %v1221
    %1857 = vmatprep.subr.bf16.mxu0 %v1226
    %1858 = vmatpush1.bf16.msra.mxu0 %v1225
    %1859 = vmatprep.subr.bf16.mxu0 %v1230
    %1860 = vmatpush1.bf16.msra.mxu0 %v1229
    %1861 = vmatprep.subr.bf16.mxu0 %v1234
    %1862 = vmatpush1.bf16.msra.mxu0 %v1233
    %1863 = vmatprep.mubr.bf16.mxu0 %v409
    %1864 = vmatmul.mubr.bf16.gmra.mrb[0].mxu0 %v408
    %v1865 = vpop.f32.mrb[0].mxu0
    %v1866 = vadd.f32 %v1803, %v1865
    %v1867 = vpop.f32.mrb[0].mxu0
    %v1868 = vadd.f32 %v1805, %v1867
    %v1869 = vpop.f32.mrb[0].mxu0
    %v1870 = vadd.f32 %v1807, %v1869
    %v1871 = vpop.f32.mrb[0].mxu0
    %v1872 = vadd.f32 %v1809, %v1871
    %1873 = vmatprep.mubr.bf16.mxu0 %v416
    %1874 = vmatmul.mubr.bf16.gmra.mrb[0].mxu0 %v415
    %v1875 = vpop.f32.mrb[0].mxu0
    %v1876 = vadd.f32 %v1813, %v1875
    %v1877 = vpop.f32.mrb[0].mxu0
    %v1878 = vadd.f32 %v1815, %v1877
    %v1879 = vpop.f32.mrb[0].mxu0
    %v1880 = vadd.f32 %v1817, %v1879
    %v1881 = vpop.f32.mrb[0].mxu0
    %v1882 = vadd.f32 %v1819, %v1881
    %1883 = vmatprep.mubr.bf16.mxu0 %v423
    %1884 = vmatmul.mubr.bf16.gmra.mrb[0].mxu0 %v422
    %v1885 = vpop.f32.mrb[0].mxu0
    %v1886 = vadd.f32 %v1823, %v1885
    %v1887 = vpop.f32.mrb[0].mxu0
    %v1888 = vadd.f32 %v1825, %v1887
    %v1889 = vpop.f32.mrb[0].mxu0
    %v1890 = vadd.f32 %v1827, %v1889
    %v1891 = vpop.f32.mrb[0].mxu0
    %v1892 = vadd.f32 %v1829, %v1891
    %1893 = vdwg.mxu0
    %1894 = vmatprep.subr.bf16.mxu0 %v1238
    %1895 = vmatpush1.bf16.msra.mxu0 %v1237
    %1896 = vmatprep.subr.bf16.mxu0 %v1242
    %1897 = vmatpush1.bf16.msra.mxu0 %v1241
    %1898 = vmatprep.subr.bf16.mxu0 0
    %1899 = vmatpush1.bf16.msra.mxu0 0
    %1900 = vmatprep.subr.bf16.mxu0 0
    %1901 = vmatpush1.bf16.msra.mxu0 0
    %1902 = vmatprep.subr.bf16.mxu0 0
    %1903 = vmatpush1.bf16.msra.mxu0 0
    %1904 = vmatprep.subr.bf16.mxu0 0
    %1905 = vmatpush1.bf16.msra.mxu0 0
    %1906 = vmatprep.subr.bf16.mxu0 0
    %1907 = vmatpush1.bf16.msra.mxu0 0
    %1908 = vmatprep.subr.bf16.mxu0 0
    %1909 = vmatpush1.bf16.msra.mxu0 0
    %1910 = vmatprep.subr.bf16.mxu0 0
    %1911 = vmatpush1.bf16.msra.mxu0 0
    %1912 = vmatprep.subr.bf16.mxu0 0
    %1913 = vmatpush1.bf16.msra.mxu0 0
    %1914 = vmatprep.subr.bf16.mxu0 0
    %1915 = vmatpush1.bf16.msra.mxu0 0
    %1916 = vmatprep.subr.bf16.mxu0 0
    %1917 = vmatpush1.bf16.msra.mxu0 0
    %1918 = vmatprep.subr.bf16.mxu0 0
    %1919 = vmatpush1.bf16.msra.mxu0 0
    %1920 = vmatprep.subr.bf16.mxu0 0
    %1921 = vmatpush1.bf16.msra.mxu0 0
    %1922 = vmatprep.subr.bf16.mxu0 0
    %1923 = vmatpush1.bf16.msra.mxu0 0
    %1924 = vmatprep.subr.bf16.mxu0 0
    %1925 = vmatpush1.bf16.msra.mxu0 0
    %1926 = vmatprep.mubr.bf16.mxu0 0
    %1927 = vmatmul.mubr.bf16.gmra.mrb[0].mxu0 %v1445
    %v1928 = vpop.f32.mrb[0].mxu0
    %v1929 = vadd.f32 %v1866, %v1928
    %v1930 = vpop.f32.mrb[0].mxu0
    %v1931 = vadd.f32 %v1868, %v1930
    %v1932 = vpop.f32.mrb[0].mxu0
    %v1933 = vadd.f32 %v1870, %v1932
    %v1934 = vpop.f32.mrb[0].mxu0
    %v1935 = vadd.f32 %v1872, %v1934
    %1936 = vmatprep.mubr.bf16.mxu0 0
    %1937 = vmatmul.mubr.bf16.gmra.mrb[0].mxu0 %v1448
    %v1938 = vpop.f32.mrb[0].mxu0
    %v1939 = vadd.f32 %v1876, %v1938
    %v1940 = vpop.f32.mrb[0].mxu0
    %v1941 = vadd.f32 %v1878, %v1940
    %v1942 = vpop.f32.mrb[0].mxu0
    %v1943 = vadd.f32 %v1880, %v1942
    %v1944 = vpop.f32.mrb[0].mxu0
    %v1945 = vadd.f32 %v1882, %v1944
    %1946 = vmatprep.mubr.bf16.mxu0 0
    %1947 = vmatmul.mubr.bf16.gmra.mrb[0].mxu0 %v1451
    %v1948 = vpop.f32.mrb[0].mxu0
    %v1949 = vadd.f32 %v1886, %v1948
    %v1950 = vpop.f32.mrb[0].mxu0
    %v1951 = vadd.f32 %v1888, %v1950
    %v1952 = vpop.f32.mrb[0].mxu0
    %v1953 = vadd.f32 %v1890, %v1952
    %v1954 = vpop.f32.mrb[0].mxu0
    %v1955 = vadd.f32 %v1892, %v1954
    %1956 = vdwg.mxu0
    %v1957 = vmax.f32 %v1677, 0.0
    %v1958 = vmax.f32 %v1679, 0.0
    %v1959 = vmax.f32 %v1929, 0.0
    %v1960 = vmax.f32 %v1931, 0.0
    %v1961 = vmax.f32 %v1681, 0.0
    %v1962 = vmax.f32 %v1683, 0.0
    %v1963 = vmax.f32 %v1933, 0.0
    %v1964 = vmax.f32 %v1935, 0.0
    %v1965 = vmax.f32 %v1687, 0.0
    %v1966 = vmax.f32 %v1689, 0.0
    %v1967 = vmax.f32 %v1939, 0.0
    %v1968 = vmax.f32 %v1941, 0.0
    %v1969 = vmax.f32 %v1691, 0.0
    %v1970 = vmax.f32 %v1693, 0.0
    %v1971 = vmax.f32 %v1943, 0.0
    %v1972 = vmax.f32 %v1945, 0.0
    %v1973 = vmax.f32 %v1697, 0.0
    %v1974 = vmax.f32 %v1699, 0.0
    %v1975 = vmax.f32 %v1949, 0.0
    %v1976 = vmax.f32 %v1951, 0.0
    %v1977 = vmax.f32 %v1701, 0.0
    %v1978 = vmax.f32 %v1703, 0.0
    %v1979 = vmax.f32 %v1953, 0.0
    %v1980 = vmax.f32 %v1955, 0.0
    %v1981 = vpack.c.bf16 %v1961, %v1957
    %v1982 = vpack.c.bf16 %v1962, %v1958
    %v1983 = vpack.c.bf16 %v1963, %v1959
    %v1984 = vpack.c.bf16 %v1964, %v1960
    %v1985 = vpack.c.bf16 %v1969, %v1965
    %v1986 = vpack.c.bf16 %v1970, %v1966
    %v1987 = vpack.c.bf16 %v1971, %v1967
    %v1988 = vpack.c.bf16 %v1972, %v1968
    %v1989 = vpack.c.bf16 %v1977, %v1973
    %v1990 = vpack.c.bf16 %v1978, %v1974
    %v1991 = vpack.c.bf16 %v1979, %v1975
    %v1992 = vpack.c.bf16 %v1980, %v1976
    %v1993 = vld [vmem:[#allocation10] sm:$0xff]
    %v1994 = vld [vmem:[#allocation10 + $0x8] sm:$0xff]
    %v1995 = vld [vmem:[#allocation10 + $0x10] sm:$0xff]
    %v1996 = vld [vmem:[#allocation10 + $0x18] sm:$0xff]
    %v1997 = vld [vmem:[#allocation10 + $0x20] sm:$0xff]
    %v1998 = vld [vmem:[#allocation10 + $0x28] sm:$0xff]
    %v1999 = vld [vmem:[#allocation10 + $0x30] sm:$0xff]
    %v2000 = vld [vmem:[#allocation10 + $0x38] sm:$0xff]
    %v2001 = vld [vmem:[#allocation10 + $0x40] sm:$0xff]
    %v2002 = vld [vmem:[#allocation10 + $0x48] sm:$0xff]
    %v2003 = vld [vmem:[#allocation10 + $0x50] sm:$0xff]
    %v2004 = vld [vmem:[#allocation10 + $0x58] sm:$0xff]
    %v2005 = vld [vmem:[#allocation10 + $0x60] sm:$0xff]
    %v2006 = vld [vmem:[#allocation10 + $0x68] sm:$0xff]
    %v2007 = vld [vmem:[#allocation10 + $0x70] sm:$0xff]
    %v2008 = vld [vmem:[#allocation10 + $0x78] sm:$0xff]
    %v2009 = vld [vmem:[#allocation10 + $0x80] sm:$0xff]
    %v2010 = vld [vmem:[#allocation10 + $0x88] sm:$0xff]
    %v2011 = vld [vmem:[#allocation10 + $0x90] sm:$0xff]
    %v2012 = vld [vmem:[#allocation10 + $0x98] sm:$0xff]
    %v2013 = vld [vmem:[#allocation10 + $0xa0] sm:$0xff]
    %v2014 = vld [vmem:[#allocation10 + $0xa8] sm:$0xff]
    %v2015 = vld [vmem:[#allocation10 + $0xb0] sm:$0xff]
    %v2016 = vld [vmem:[#allocation10 + $0xb8] sm:$0xff]
    %v2017 = vld [vmem:[#allocation10 + $0xc0] sm:$0xff]
    %v2018 = vld [vmem:[#allocation10 + $0xc8] sm:$0xff]
    %v2019 = vld [vmem:[#allocation10 + $0xd0] sm:$0xff]
    %v2020 = vld [vmem:[#allocation10 + $0xd8] sm:$0xff]
    %v2021 = vld [vmem:[#allocation10 + $0xe0] sm:$0xff]
    %v2022 = vld [vmem:[#allocation10 + $0xe8] sm:$0xff]
    %v2023 = vld [vmem:[#allocation10 + $0xf0] sm:$0xff]
    %v2024 = vld [vmem:[#allocation10 + $0xf8] sm:$0xff]
    %v2025 = vld [vmem:[#allocation10 + $0x100] sm:$0xff]
    %v2026 = vld [vmem:[#allocation10 + $0x108] sm:$0xff]
    %v2027 = vld [vmem:[#allocation10 + $0x110] sm:$0xff]
    %v2028 = vld [vmem:[#allocation10 + $0x118] sm:$0xff]
    %v2029 = vld [vmem:[#allocation10 + $0x120] sm:$0xff]
    %v2030 = vld [vmem:[#allocation10 + $0x128] sm:$0xff]
    %v2031 = vld [vmem:[#allocation10 + $0x130] sm:$0xff]
    %v2032 = vld [vmem:[#allocation10 + $0x138] sm:$0xff]
    %v2033 = vld [vmem:[#allocation10 + $0x140] sm:$0xff]
    %v2034 = vld [vmem:[#allocation10 + $0x148] sm:$0xff]
    %v2035 = vld [vmem:[#allocation10 + $0x150] sm:$0xff]
    %v2036 = vld [vmem:[#allocation10 + $0x158] sm:$0xff]
    %v2037 = vld [vmem:[#allocation10 + $0x160] sm:$0xff]
    %v2038 = vld [vmem:[#allocation10 + $0x168] sm:$0xff]
    %v2039 = vld [vmem:[#allocation10 + $0x170] sm:$0xff]
    %v2040 = vld [vmem:[#allocation10 + $0x178] sm:$0xff]
    %v2041 = vld [vmem:[#allocation10 + $0x180] sm:$0xff]
    %v2042 = vld [vmem:[#allocation10 + $0x188] sm:$0xff]
    %v2043 = vld [vmem:[#allocation10 + $0x190] sm:$0xff]
    %v2044 = vld [vmem:[#allocation10 + $0x198] sm:$0xff]
    %v2045 = vld [vmem:[#allocation10 + $0x1a0] sm:$0xff]
    %v2046 = vld [vmem:[#allocation10 + $0x1a8] sm:$0xff]
    %v2047 = vld [vmem:[#allocation10 + $0x1b0] sm:$0xff]
    %v2048 = vld [vmem:[#allocation10 + $0x1b8] sm:$0xff]
    %v2049 = vld [vmem:[#allocation10 + $0x1c0] sm:$0xff]
    %v2050 = vld [vmem:[#allocation10 + $0x1c8] sm:$0xff]
    %v2051 = vld [vmem:[#allocation10 + $0x1d0] sm:$0xff]
    %v2052 = vld [vmem:[#allocation10 + $0x1d8] sm:$0xff]
    %v2053 = vld [vmem:[#allocation10 + $0x1e0] sm:$0xff]
    %v2054 = vld [vmem:[#allocation10 + $0x1e8] sm:$0xff]
    %v2055 = vld [vmem:[#allocation10 + $0x1f0] sm:$0x33]
    %v2056 = vld [vmem:[%s4] sm:$0x3]
    %v2058 = vlaneseq
    %v2059 = vshrl.u32 %v2058, 7
    %v2060 = vsub.s32 0, %v2059
    %v2061 = vrot.slane %v2056, %v2060
    %v2062 = vlaneseq
    %v2063 = vshrl.u32 %v2062, 7
    %v2064 = vsub.s32 1, %v2063
    %v2065 = vrot.slane %v2056, %v2064
    %v2131 = vunpack.c.l.b16 %v1993
    %v2132 = vunpack.c.h.b16 %v1993
    %v2133 = vunpack.c.l.b16 %v1994
    %v2134 = vunpack.c.h.b16 %v1994
    %v2135 = vunpack.c.l.b16 %v1995
    %v2136 = vunpack.c.h.b16 %v1995
    %v2137 = vunpack.c.l.b16 %v1996
    %v2138 = vunpack.c.h.b16 %v1996
    %v2139 = vunpack.c.l.b16 %v1997
    %v2140 = vunpack.c.h.b16 %v1997
    %v2141 = vunpack.c.l.b16 %v1998
    %v2142 = vunpack.c.h.b16 %v1998
    %v2143 = vunpack.c.l.b16 %v1999
    %v2144 = vunpack.c.h.b16 %v1999
    %v2145 = vunpack.c.l.b16 %v2000
    %v2146 = vunpack.c.h.b16 %v2000
    %v2147 = vunpack.c.l.b16 %v2001
    %v2148 = vunpack.c.h.b16 %v2001
    %v2149 = vunpack.c.l.b16 %v2002
    %v2150 = vunpack.c.h.b16 %v2002
    %v2151 = vunpack.c.l.b16 %v2003
    %v2152 = vunpack.c.h.b16 %v2003
    %v2153 = vunpack.c.l.b16 %v2004
    %v2154 = vunpack.c.h.b16 %v2004
    %v2155 = vunpack.c.l.b16 %v2005
    %v2156 = vunpack.c.h.b16 %v2005
    %v2157 = vunpack.c.l.b16 %v2006
    %v2158 = vunpack.c.h.b16 %v2006
    %v2159 = vunpack.c.l.b16 %v2007
    %v2160 = vunpack.c.h.b16 %v2007
    %v2161 = vunpack.c.l.b16 %v2008
    %v2162 = vunpack.c.h.b16 %v2008
    %v2163 = vunpack.c.l.b16 %v2009
    %v2164 = vunpack.c.h.b16 %v2009
    %v2165 = vunpack.c.l.b16 %v2010
    %v2166 = vunpack.c.h.b16 %v2010
    %v2167 = vunpack.c.l.b16 %v2011
    %v2168 = vunpack.c.h.b16 %v2011
    %v2169 = vunpack.c.l.b16 %v2012
    %v2170 = vunpack.c.h.b16 %v2012
    %v2171 = vunpack.c.l.b16 %v2013
    %v2172 = vunpack.c.h.b16 %v2013
    %v2173 = vunpack.c.l.b16 %v2014
    %v2174 = vunpack.c.h.b16 %v2014
    %v2175 = vunpack.c.l.b16 %v2015
    %v2176 = vunpack.c.h.b16 %v2015
    %v2177 = vunpack.c.l.b16 %v2016
    %v2178 = vunpack.c.h.b16 %v2016
    %v2179 = vunpack.c.l.b16 %v2017
    %v2180 = vunpack.c.h.b16 %v2017
    %v2181 = vunpack.c.l.b16 %v2018
    %v2182 = vunpack.c.h.b16 %v2018
    %v2183 = vunpack.c.l.b16 %v2019
    %v2184 = vunpack.c.h.b16 %v2019
    %v2185 = vunpack.c.l.b16 %v2020
    %v2186 = vunpack.c.h.b16 %v2020
    %v2187 = vunpack.c.l.b16 %v2021
    %v2188 = vunpack.c.h.b16 %v2021
    %v2189 = vunpack.c.l.b16 %v2022
    %v2190 = vunpack.c.h.b16 %v2022
    %v2191 = vunpack.c.l.b16 %v2023
    %v2192 = vunpack.c.h.b16 %v2023
    %v2193 = vunpack.c.l.b16 %v2024
    %v2194 = vunpack.c.h.b16 %v2024
    %v2195 = vunpack.c.l.b16 %v2025
    %v2196 = vunpack.c.h.b16 %v2025
    %v2197 = vunpack.c.l.b16 %v2026
    %v2198 = vunpack.c.h.b16 %v2026
    %v2199 = vunpack.c.l.b16 %v2027
    %v2200 = vunpack.c.h.b16 %v2027
    %v2201 = vunpack.c.l.b16 %v2028
    %v2202 = vunpack.c.h.b16 %v2028
    %v2203 = vunpack.c.l.b16 %v2029
    %v2204 = vunpack.c.h.b16 %v2029
    %v2205 = vunpack.c.l.b16 %v2030
    %v2206 = vunpack.c.h.b16 %v2030
    %v2207 = vunpack.c.l.b16 %v2031
    %v2208 = vunpack.c.h.b16 %v2031
    %v2209 = vunpack.c.l.b16 %v2032
    %v2210 = vunpack.c.h.b16 %v2032
    %v2211 = vunpack.c.l.b16 %v2033
    %v2212 = vunpack.c.h.b16 %v2033
    %v2213 = vunpack.c.l.b16 %v2034
    %v2214 = vunpack.c.h.b16 %v2034
    %v2215 = vunpack.c.l.b16 %v2035
    %v2216 = vunpack.c.h.b16 %v2035
    %v2217 = vunpack.c.l.b16 %v2036
    %v2218 = vunpack.c.h.b16 %v2036
    %v2219 = vunpack.c.l.b16 %v2037
    %v2220 = vunpack.c.h.b16 %v2037
    %v2221 = vunpack.c.l.b16 %v2038
    %v2222 = vunpack.c.h.b16 %v2038
    %v2223 = vunpack.c.l.b16 %v2039
    %v2224 = vunpack.c.h.b16 %v2039
    %v2225 = vunpack.c.l.b16 %v2040
    %v2226 = vunpack.c.h.b16 %v2040
    %v2227 = vunpack.c.l.b16 %v2041
    %v2228 = vunpack.c.h.b16 %v2041
    %v2229 = vunpack.c.l.b16 %v2042
    %v2230 = vunpack.c.h.b16 %v2042
    %v2231 = vunpack.c.l.b16 %v2043
    %v2232 = vunpack.c.h.b16 %v2043
    %v2233 = vunpack.c.l.b16 %v2044
    %v2234 = vunpack.c.h.b16 %v2044
    %v2235 = vunpack.c.l.b16 %v2045
    %v2236 = vunpack.c.h.b16 %v2045
    %v2237 = vunpack.c.l.b16 %v2046
    %v2238 = vunpack.c.h.b16 %v2046
    %v2239 = vunpack.c.l.b16 %v2047
    %v2240 = vunpack.c.h.b16 %v2047
    %v2241 = vunpack.c.l.b16 %v2048
    %v2242 = vunpack.c.h.b16 %v2048
    %v2243 = vunpack.c.l.b16 %v2049
    %v2244 = vunpack.c.h.b16 %v2049
    %v2245 = vunpack.c.l.b16 %v2050
    %v2246 = vunpack.c.h.b16 %v2050
    %v2247 = vunpack.c.l.b16 %v2051
    %v2248 = vunpack.c.h.b16 %v2051
    %v2249 = vunpack.c.l.b16 %v2052
    %v2250 = vunpack.c.h.b16 %v2052
    %v2251 = vunpack.c.l.b16 %v2053
    %v2252 = vunpack.c.h.b16 %v2053
    %v2253 = vunpack.c.l.b16 %v2054
    %v2254 = vunpack.c.h.b16 %v2054
    %v2255 = vunpack.c.l.b16 %v2055
    %v2256 = vunpack.c.h.b16 %v2055
    %v2257 = vpack.c.b16 %v2133, %v2131
    %v2258 = vpack.c.b16 %v2134, %v2132
    %v2259 = vpack.c.b16 %v2137, %v2135
    %v2260 = vpack.c.b16 %v2138, %v2136
    %v2261 = vpack.c.b16 %v2141, %v2139
    %v2262 = vpack.c.b16 %v2142, %v2140
    %v2263 = vpack.c.b16 %v2145, %v2143
    %v2264 = vpack.c.b16 %v2146, %v2144
    %v2265 = vpack.c.b16 %v2149, %v2147
    %v2266 = vpack.c.b16 %v2150, %v2148
    %v2267 = vpack.c.b16 %v2153, %v2151
    %v2268 = vpack.c.b16 %v2154, %v2152
    %v2269 = vpack.c.b16 %v2157, %v2155
    %v2270 = vpack.c.b16 %v2158, %v2156
    %v2271 = vpack.c.b16 %v2161, %v2159
    %v2272 = vpack.c.b16 %v2162, %v2160
    %v2273 = vpack.c.b16 %v2165, %v2163
    %v2274 = vpack.c.b16 %v2166, %v2164
    %v2275 = vpack.c.b16 %v2169, %v2167
    %v2276 = vpack.c.b16 %v2170, %v2168
    %v2277 = vpack.c.b16 %v2173, %v2171
    %v2278 = vpack.c.b16 %v2174, %v2172
    %v2279 = vpack.c.b16 %v2177, %v2175
    %v2280 = vpack.c.b16 %v2178, %v2176
    %v2281 = vpack.c.b16 %v2181, %v2179
    %v2282 = vpack.c.b16 %v2182, %v2180
    %v2283 = vpack.c.b16 %v2185, %v2183
    %v2284 = vpack.c.b16 %v2186, %v2184
    %v2285 = vpack.c.b16 %v2189, %v2187
    %v2286 = vpack.c.b16 %v2190, %v2188
    %v2287 = vpack.c.b16 %v2193, %v2191
    %v2288 = vpack.c.b16 %v2194, %v2192
    %v2289 = vpack.c.b16 %v2197, %v2195
    %v2290 = vpack.c.b16 %v2198, %v2196
    %v2291 = vpack.c.b16 %v2201, %v2199
    %v2292 = vpack.c.b16 %v2202, %v2200
    %v2293 = vpack.c.b16 %v2205, %v2203
    %v2294 = vpack.c.b16 %v2206, %v2204
    %v2295 = vpack.c.b16 %v2209, %v2207
    %v2296 = vpack.c.b16 %v2210, %v2208
    %v2297 = vpack.c.b16 %v2213, %v2211
    %v2298 = vpack.c.b16 %v2214, %v2212
    %v2299 = vpack.c.b16 %v2217, %v2215
    %v2300 = vpack.c.b16 %v2218, %v2216
    %v2301 = vpack.c.b16 %v2221, %v2219
    %v2302 = vpack.c.b16 %v2222, %v2220
    %v2303 = vpack.c.b16 %v2225, %v2223
    %v2304 = vpack.c.b16 %v2226, %v2224
    %v2305 = vpack.c.b16 %v2229, %v2227
    %v2306 = vpack.c.b16 %v2230, %v2228
    %v2307 = vpack.c.b16 %v2233, %v2231
    %v2308 = vpack.c.b16 %v2234, %v2232
    %v2309 = vpack.c.b16 %v2237, %v2235
    %v2310 = vpack.c.b16 %v2238, %v2236
    %v2311 = vpack.c.b16 %v2241, %v2239
    %v2312 = vpack.c.b16 %v2242, %v2240
    %v2313 = vpack.c.b16 %v2245, %v2243
    %v2314 = vpack.c.b16 %v2246, %v2244
    %v2315 = vpack.c.b16 %v2249, %v2247
    %v2316 = vpack.c.b16 %v2250, %v2248
    %v2317 = vpack.c.b16 %v2253, %v2251
    %v2318 = vpack.c.b16 %v2254, %v2252
    %v2319 = vpack.c.b16 %v2255, %v2255
    %v2320 = vpack.c.b16 %v2256, %v2256
    %vm2383 = vcmask 949248
    %v2385 = vsel %vm2383, %v1984, 0
    %v2388 = vsel %vm2383, %v1988, 0
    %v2391 = vsel %vm2383, %v1992, 0
    %vm2393 = vcmask 1041408
    %v2395 = vsel %vm2393, %v2319, 0
    %v2398 = vsel %vm2393, %v2320, 0
    %2400 = vmatprep.subr.bf16.mxu0 %v2258
    %2401 = vmatpush1.bf16.msra.mxu0 %v2257
    %2402 = vmatprep.subr.bf16.mxu0 %v2260
    %2403 = vmatpush1.bf16.msra.mxu0 %v2259
    %2404 = vmatprep.subr.bf16.mxu0 %v2262
    %2405 = vmatpush1.bf16.msra.mxu0 %v2261
    %2406 = vmatprep.subr.bf16.mxu0 %v2264
    %2407 = vmatpush1.bf16.msra.mxu0 %v2263
    %2408 = vmatprep.subr.bf16.mxu0 %v2266
    %2409 = vmatpush1.bf16.msra.mxu0 %v2265
    %2410 = vmatprep.subr.bf16.mxu0 %v2268
    %2411 = vmatpush1.bf16.msra.mxu0 %v2267
    %2412 = vmatprep.subr.bf16.mxu0 %v2270
    %2413 = vmatpush1.bf16.msra.mxu0 %v2269
    %2414 = vmatprep.subr.bf16.mxu0 %v2272
    %2415 = vmatpush1.bf16.msra.mxu0 %v2271
    %2416 = vmatprep.subr.bf16.mxu0 %v2274
    %2417 = vmatpush1.bf16.msra.mxu0 %v2273
    %2418 = vmatprep.subr.bf16.mxu0 %v2276
    %2419 = vmatpush1.bf16.msra.mxu0 %v2275
    %2420 = vmatprep.subr.bf16.mxu0 %v2278
    %2421 = vmatpush1.bf16.msra.mxu0 %v2277
    %2422 = vmatprep.subr.bf16.mxu0 %v2280
    %2423 = vmatpush1.bf16.msra.mxu0 %v2279
    %2424 = vmatprep.subr.bf16.mxu0 %v2282
    %2425 = vmatpush1.bf16.msra.mxu0 %v2281
    %2426 = vmatprep.subr.bf16.mxu0 %v2284
    %2427 = vmatpush1.bf16.msra.mxu0 %v2283
    %2428 = vmatprep.subr.bf16.mxu0 %v2286
    %2429 = vmatpush1.bf16.msra.mxu0 %v2285
    %2430 = vmatprep.subr.bf16.mxu0 %v2288
    %2431 = vmatpush1.bf16.msra.mxu0 %v2287
    %2432 = vmatprep.mubr.bf16.mxu0 %v1982
    %2433 = vmatmul.mubr.bf16.gmra.mrb[0].mxu0 %v1981
    %v2434 = vpop.f32.mrb[0].mxu0
    %v2435 = vadd.f32 %v2061, %v2434
    %v2436 = vpop.f32.mrb[0].mxu0
    %v2437 = vadd.f32 %v2065, %v2436
    %v2438 = vpop.f32.mrb[0].mxu0
    %v2439 = vadd.f32 %v2061, %v2438
    %v2440 = vpop.f32.mrb[0].mxu0
    %v2441 = vadd.f32 %v2065, %v2440
    %2442 = vmatprep.mubr.bf16.mxu0 %v1986
    %2443 = vmatmul.mubr.bf16.gmra.mrb[0].mxu0 %v1985
    %v2444 = vpop.f32.mrb[0].mxu0
    %v2445 = vadd.f32 %v2061, %v2444
    %v2446 = vpop.f32.mrb[0].mxu0
    %v2447 = vadd.f32 %v2065, %v2446
    %v2448 = vpop.f32.mrb[0].mxu0
    %v2449 = vadd.f32 %v2061, %v2448
    %v2450 = vpop.f32.mrb[0].mxu0
    %v2451 = vadd.f32 %v2065, %v2450
    %2452 = vmatprep.mubr.bf16.mxu0 %v1990
    %2453 = vmatmul.mubr.bf16.gmra.mrb[0].mxu0 %v1989
    %v2454 = vpop.f32.mrb[0].mxu0
    %v2455 = vadd.f32 %v2061, %v2454
    %v2456 = vpop.f32.mrb[0].mxu0
    %v2457 = vadd.f32 %v2065, %v2456
    %v2458 = vpop.f32.mrb[0].mxu0
    %v2459 = vadd.f32 %v2061, %v2458
    %v2460 = vpop.f32.mrb[0].mxu0
    %v2461 = vadd.f32 %v2065, %v2460
    %2462 = vdwg.mxu0
    %2463 = vmatprep.subr.bf16.mxu0 %v2290
    %2464 = vmatpush1.bf16.msra.mxu0 %v2289
    %2465 = vmatprep.subr.bf16.mxu0 %v2292
    %2466 = vmatpush1.bf16.msra.mxu0 %v2291
    %2467 = vmatprep.subr.bf16.mxu0 %v2294
    %2468 = vmatpush1.bf16.msra.mxu0 %v2293
    %2469 = vmatprep.subr.bf16.mxu0 %v2296
    %2470 = vmatpush1.bf16.msra.mxu0 %v2295
    %2471 = vmatprep.subr.bf16.mxu0 %v2298
    %2472 = vmatpush1.bf16.msra.mxu0 %v2297
    %2473 = vmatprep.subr.bf16.mxu0 %v2300
    %2474 = vmatpush1.bf16.msra.mxu0 %v2299
    %2475 = vmatprep.subr.bf16.mxu0 %v2302
    %2476 = vmatpush1.bf16.msra.mxu0 %v2301
    %2477 = vmatprep.subr.bf16.mxu0 %v2304
    %2478 = vmatpush1.bf16.msra.mxu0 %v2303
    %2479 = vmatprep.subr.bf16.mxu0 %v2306
    %2480 = vmatpush1.bf16.msra.mxu0 %v2305
    %2481 = vmatprep.subr.bf16.mxu0 %v2308
    %2482 = vmatpush1.bf16.msra.mxu0 %v2307
    %2483 = vmatprep.subr.bf16.mxu0 %v2310
    %2484 = vmatpush1.bf16.msra.mxu0 %v2309
    %2485 = vmatprep.subr.bf16.mxu0 %v2312
    %2486 = vmatpush1.bf16.msra.mxu0 %v2311
    %2487 = vmatprep.subr.bf16.mxu0 %v2314
    %2488 = vmatpush1.bf16.msra.mxu0 %v2313
    %2489 = vmatprep.subr.bf16.mxu0 %v2316
    %2490 = vmatpush1.bf16.msra.mxu0 %v2315
    %2491 = vmatprep.subr.bf16.mxu0 %v2318
    %2492 = vmatpush1.bf16.msra.mxu0 %v2317
    %2493 = vmatprep.subr.bf16.mxu0 %v2398
    %2494 = vmatpush1.bf16.msra.mxu0 %v2395
    %2495 = vmatprep.mubr.bf16.mxu0 %v2385
    %2496 = vmatmul.mubr.bf16.gmra.mrb[0].mxu0 %v1983
    %v2497 = vpop.f32.mrb[0].mxu0
    %v2498 = vadd.f32 %v2435, %v2497
    %v2499 = vpop.f32.mrb[0].mxu0
    %v2500 = vadd.f32 %v2437, %v2499
    %v2501 = vpop.f32.mrb[0].mxu0
    %v2502 = vadd.f32 %v2439, %v2501
    %v2503 = vpop.f32.mrb[0].mxu0
    %v2504 = vadd.f32 %v2441, %v2503
    %2505 = vmatprep.mubr.bf16.mxu0 %v2388
    %2506 = vmatmul.mubr.bf16.gmra.mrb[0].mxu0 %v1987
    %v2507 = vpop.f32.mrb[0].mxu0
    %v2508 = vadd.f32 %v2445, %v2507
    %v2509 = vpop.f32.mrb[0].mxu0
    %v2510 = vadd.f32 %v2447, %v2509
    %v2511 = vpop.f32.mrb[0].mxu0
    %v2512 = vadd.f32 %v2449, %v2511
    %v2513 = vpop.f32.mrb[0].mxu0
    %v2514 = vadd.f32 %v2451, %v2513
    %2515 = vmatprep.mubr.bf16.mxu0 %v2391
    %2516 = vmatmul.mubr.bf16.gmra.mrb[0].mxu0 %v1991
    %v2517 = vpop.f32.mrb[0].mxu0
    %v2518 = vadd.f32 %v2455, %v2517
    %v2519 = vpop.f32.mrb[0].mxu0
    %v2520 = vadd.f32 %v2457, %v2519
    %v2521 = vpop.f32.mrb[0].mxu0
    %v2522 = vadd.f32 %v2459, %v2521
    %v2523 = vpop.f32.mrb[0].mxu0
    %v2524 = vadd.f32 %v2461, %v2523
    %2525 = vdwg.mxu0
    %v2526 = vtanh.pop %v2498
    %v2527 = vtanh.pop %v2502
    %v2528 = vtanh.pop %v2508
    %v2529 = vtanh.pop %v2512
    %v2530 = vtanh.pop %v2518
    %v2531 = vtanh.pop %v2522
    %v2532 = vsub.f32 0.0, %v2500
    %v2533 = vsub.f32 0.0, %v2504
    %v2534 = vsub.f32 0.0, %v2510
    %v2535 = vsub.f32 0.0, %v2514
    %v2536 = vsub.f32 0.0, %v2520
    %v2537 = vsub.f32 0.0, %v2524
    %v2538 = vmul.f32 %v2532, 1.442695
    %v2539 = vpow.pop %v2538
    %v2540 = vmul.f32 %v2533, 1.442695
    %v2541 = vpow.pop %v2540
    %v2542 = vmul.f32 %v2534, 1.442695
    %v2543 = vpow.pop %v2542
    %v2544 = vmul.f32 %v2535, 1.442695
    %v2545 = vpow.pop %v2544
    %v2546 = vmul.f32 %v2536, 1.442695
    %v2547 = vpow.pop %v2546
    %v2548 = vmul.f32 %v2537, 1.442695
    %v2549 = vpow.pop %v2548
    %v2550 = vadd.f32 %v2539, 1.0
    %v2551 = vadd.f32 %v2541, 1.0
    %v2552 = vadd.f32 %v2543, 1.0
    %v2553 = vadd.f32 %v2545, 1.0
    %v2554 = vadd.f32 %v2547, 1.0
    %v2555 = vadd.f32 %v2549, 1.0
    %v2556 = vrcp.pop %v2550
    %v2557 = vmul.f32 1.0, %v2556
    %v2558 = vrcp.pop %v2551
    %v2559 = vmul.f32 1.0, %v2558
    %v2560 = vrcp.pop %v2552
    %v2561 = vmul.f32 1.0, %v2560
    %v2562 = vrcp.pop %v2553
    %v2563 = vmul.f32 1.0, %v2562
    %v2564 = vrcp.pop %v2554
    %v2565 = vmul.f32 1.0, %v2564
    %v2566 = vrcp.pop %v2555
    %v2567 = vmul.f32 1.0, %v2566
    %v2568 = vmul.f32 %v2526, %v2557
    %v2569 = vmul.f32 %v2527, %v2559
    %v2570 = vmul.f32 %v2528, %v2561
    %v2571 = vmul.f32 %v2529, %v2563
    %v2572 = vmul.f32 %v2530, %v2565
    %v2573 = vmul.f32 %v2531, %v2567
    %v2574 = vld [vmem:[%s5] sm:$0x1]
    %v2575 = vpack.c.bf16 %v2569, %v2568
    %v2576 = vpack.c.bf16 %v2571, %v2570
    %v2577 = vpack.c.bf16 %v2573, %v2572
    %2578 = vmatprep.subr.bf16.mxu0 0
    %2579 = vmatpush1.bf16.xpose.msra.mxu0 %v2575
    %2580 = vmatprep.subr.bf16.mxu0 0
    %2581 = vmatpush1.bf16.xpose.msra.mxu0 %v2576
    %2582 = vmatprep.subr.bf16.mxu0 0
    %2583 = vmatpush1.bf16.xpose.msra.mxu0 %v2577
    %2584 = vmatprep.subr.bf16.mxu0 0
    %2585 = vmatpush1.bf16.xpose.msra.mxu0 0
    %2586 = vmatprep.subr.bf16.mxu0 0
    %2587 = vmatpush1.bf16.xpose.msra.mxu0 0
    %2588 = vmatprep.subr.bf16.mxu0 0
    %2589 = vmatpush1.bf16.xpose.msra.mxu0 0
    %2590 = vmatprep.subr.bf16.mxu0 0
    %2591 = vmatpush1.bf16.xpose.msra.mxu0 0
    %2592 = vmatprep.subr.bf16.mxu0 0
    %2593 = vmatpush1.bf16.xpose.msra.mxu0 0
    %2594 = vmatprep.subr.bf16.mxu0 0
    %2595 = vmatpush1.bf16.xpose.msra.mxu0 0
    %2596 = vmatprep.subr.bf16.mxu0 0
    %2597 = vmatpush1.bf16.xpose.msra.mxu0 0
    %2598 = vmatprep.subr.bf16.mxu0 0
    %2599 = vmatpush1.bf16.xpose.msra.mxu0 0
    %2600 = vmatprep.subr.bf16.mxu0 0
    %2601 = vmatpush1.bf16.xpose.msra.mxu0 0
    %2602 = vmatprep.subr.bf16.mxu0 0
    %2603 = vmatpush1.bf16.xpose.msra.mxu0 0
    %2604 = vmatprep.subr.bf16.mxu0 0
    %2605 = vmatpush1.bf16.xpose.msra.mxu0 0
    %2606 = vmatprep.subr.bf16.mxu0 0
    %2607 = vmatpush1.bf16.xpose.msra.mxu0 0
    %2608 = vmatprep.subr.bf16.mxu0 0
    %2609 = vmatpush1.bf16.xpose.msra.mxu0 0
    %2610 = vmatprep.mubr.bf16.mxu0 0
    %2611 = vmatmul.mubr.bf16.gmra.mrb[0].mxu0 %v2574
    %v2612 = vpop.f32.mrb[0].mxu0
    %v2613 = vadd.f32 0.0, %v2612
    %v2614 = vpop.f32.mrb[0].mxu0
    %v2615 = vpop.f32.mrb[0].mxu0
    %v2616 = vpop.f32.mrb[0].mxu0
    %2617 = vdwg.mxu0
    %s2618 = sadd.s32 0, 0
    %s2619 = smul.u32 %s2618, 48
    %v2620 = vlaneseq
    %v2621 = vand.u32 %v2620, 127
    %v2622 = vstv %s2619
    %v2623 = vadd.s32 %v2622, %v2621
    %vm2624 = vcmp.lt.s32.totalorder %v2623, 40
    %v2625 = vsel %vm2624, %v2613, -1e+30
    %vm2626 = vcmask 385024
    %2627 = vst.msk [vmem:[#allocation11] sm:$0x1] %vm2626, %v2625
    %v2628 = vld [vmem:[#allocation2] sm:$0x1]
    %v2629 = vsel %vm2626, %v2625, -inf
    %2630 = vmax.xlane.f32.xlu0 %v2629
    %v2631 = vpop.xlane.xlu0 %2630
    %v2632 = vmax.f32 %v2628, %v2631
    %v2633 = vsub.f32 %v2628, %v2632
    %v2634 = vmul.f32 %v2633, 1.442695
    %v2635 = vpow.pop %v2634
    %2637 = vset.pattern.permute.xlu0 0
    %2638 = vperm.xlu0 %2637, %v2632
    %v2639 = vpop.permute.xlu0 %2638
    %v2641 = vlaneseq
    %v2642 = vshrl.u32 %v2641, 7
    %v2643 = vsub.s32 0, %v2642
    %v2644 = vrot.slane %v2639, %v2643
    %v2645 = vsub.f32 %v2625, %v2644
    %v2646 = vmul.f32 %v2645, 1.442695
    %v2647 = vpow.pop %v2646
    %v2648 = vld [vmem:[#allocation3] sm:$0x1]
    %v2649 = vmul.f32 %v2635, %v2648
    %v2650 = vsel %vm2626, %v2647, 0.0
    %2651 = vadd.xlane.f32.xlu0 %v2650
    %v2652 = vpop.xlane.xlu0 %2651
    %v2653 = vadd.f32 %v2649, %v2652
    %vm2654 = vcmask 0
    %2655 = vst.msk [vmem:[#allocation3] sm:$0x1] %vm2654, %v2653
    %v2656 = vld [vmem:[#allocation4] sm:$0xf]
    %2658 = vset.pattern.permute.xlu0 0
    %2659 = vperm.xlu0 %2658, %v2635
    %v2660 = vpop.permute.xlu0 %2659
    %v2662 = vlaneseq
    %v2663 = vshrl.u32 %v2662, 7
    %v2664 = vsub.s32 0, %v2663
    %v2665 = vrot.slane %v2660, %v2664
    %v2666 = vmul.f32 %v2665, %v2656
    %v2667 = vpack.c.bf16 %v2647, %v2647
    %vm2668 = vcmask 392192
    %v2670 = vsel %vm2668, %v2667, 0
    %2672 = vmatprep.subr.bf16.mxu0 %v1982
    %2673 = vmatpush1.bf16.msra.mxu0 %v1981
    %2674 = vmatprep.subr.bf16.mxu0 %v1986
    %2675 = vmatpush1.bf16.msra.mxu0 %v1985
    %2676 = vmatprep.subr.bf16.mxu0 %v1990
    %2677 = vmatpush1.bf16.msra.mxu0 %v1989
    %2678 = vmatprep.subr.bf16.mxu0 0
    %2679 = vmatpush1.bf16.msra.mxu0 0
    %2680 = vmatprep.subr.bf16.mxu0 0
    %2681 = vmatpush1.bf16.msra.mxu0 0
    %2682 = vmatprep.subr.bf16.mxu0 0
    %2683 = vmatpush1.bf16.msra.mxu0 0
    %2684 = vmatprep.subr.bf16.mxu0 0
    %2685 = vmatpush1.bf16.msra.mxu0 0
    %2686 = vmatprep.subr.bf16.mxu0 0
    %2687 = vmatpush1.bf16.msra.mxu0 0
    %2688 = vmatprep.subr.bf16.mxu0 0
    %2689 = vmatpush1.bf16.msra.mxu0 0
    %2690 = vmatprep.subr.bf16.mxu0 0
    %2691 = vmatpush1.bf16.msra.mxu0 0
    %2692 = vmatprep.subr.bf16.mxu0 0
    %2693 = vmatpush1.bf16.msra.mxu0 0
    %2694 = vmatprep.subr.bf16.mxu0 0
    %2695 = vmatpush1.bf16.msra.mxu0 0
    %2696 = vmatprep.subr.bf16.mxu0 0
    %2697 = vmatpush1.bf16.msra.mxu0 0
    %2698 = vmatprep.subr.bf16.mxu0 0
    %2699 = vmatpush1.bf16.msra.mxu0 0
    %2700 = vmatprep.subr.bf16.mxu0 0
    %2701 = vmatpush1.bf16.msra.mxu0 0
    %2702 = vmatprep.subr.bf16.mxu0 0
    %2703 = vmatpush1.bf16.msra.mxu0 0
    %2704 = vmatprep.mubr.bf16.mxu0 0
    %2705 = vmatmul.mubr.bf16.gmra.mrb[0].mxu0 %v2670
    %v2706 = vpop.f32.mrb[0].mxu0
    %v2707 = vadd.f32 0.0, %v2706
    %v2708 = vpop.f32.mrb[0].mxu0
    %v2709 = vadd.f32 0.0, %v2708
    %v2710 = vpop.f32.mrb[0].mxu0
    %v2711 = vpop.f32.mrb[0].mxu0
    %2712 = vdwg.mxu0
    %2713 = vmatprep.subr.bf16.mxu0 %v1984
    %2714 = vmatpush1.bf16.msra.mxu0 %v1983
    %2715 = vmatprep.subr.bf16.mxu0 %v1988
    %2716 = vmatpush1.bf16.msra.mxu0 %v1987
    %2717 = vmatprep.subr.bf16.mxu0 %v1992
    %2718 = vmatpush1.bf16.msra.mxu0 %v1991
    %2719 = vmatprep.subr.bf16.mxu0 0
    %2720 = vmatpush1.bf16.msra.mxu0 0
    %2721 = vmatprep.subr.bf16.mxu0 0
    %2722 = vmatpush1.bf16.msra.mxu0 0
    %2723 = vmatprep.subr.bf16.mxu0 0
    %2724 = vmatpush1.bf16.msra.mxu0 0
    %2725 = vmatprep.subr.bf16.mxu0 0
    %2726 = vmatpush1.bf16.msra.mxu0 0
    %2727 = vmatprep.subr.bf16.mxu0 0
    %2728 = vmatpush1.bf16.msra.mxu0 0
    %2729 = vmatprep.subr.bf16.mxu0 0
    %2730 = vmatpush1.bf16.msra.mxu0 0
    %2731 = vmatprep.subr.bf16.mxu0 0
    %2732 = vmatpush1.bf16.msra.mxu0 0
    %2733 = vmatprep.subr.bf16.mxu0 0
    %2734 = vmatpush1.bf16.msra.mxu0 0
    %2735 = vmatprep.subr.bf16.mxu0 0
    %2736 = vmatpush1.bf16.msra.mxu0 0
    %2737 = vmatprep.subr.bf16.mxu0 0
    %2738 = vmatpush1.bf16.msra.mxu0 0
    %2739 = vmatprep.subr.bf16.mxu0 0
    %2740 = vmatpush1.bf16.msra.mxu0 0
    %2741 = vmatprep.subr.bf16.mxu0 0
    %2742 = vmatpush1.bf16.msra.mxu0 0
    %2743 = vmatprep.subr.bf16.mxu0 0
    %2744 = vmatpush1.bf16.msra.mxu0 0
    %2745 = vmatprep.mubr.bf16.mxu0 0
    %2746 = vmatmul.mubr.bf16.gmra.mrb[0].mxu0 %v2670
    %v2747 = vpop.f32.mrb[0].mxu0
    %v2748 = vadd.f32 0.0, %v2747
    %v2749 = vpop.f32.mrb[0].mxu0
    %v2750 = vadd.f32 0.0, %v2749
    %v2751 = vpop.f32.mrb[0].mxu0
    %v2752 = vpop.f32.mrb[0].mxu0
    %2753 = vdwg.mxu0
    %v2758 = vcombine.low %v2707, %v2709
    %v2759 = vcombine.low %v2748, %v2750
    %v2761 = vunpack.c.l.s4 1966171168
    %v2762 = vunpack.c.0.s8 %v2761
    %v2763 = vlaneseq
    %v2764 = vshrl.u32 %v2763, 7
    %v2765 = vsub.s32 %v2762, %v2764
    %v2766 = vrot.slane %v2758, %v2765
    %v2768 = vunpack.c.l.s4 1966171168
    %v2769 = vunpack.c.0.s8 %v2768
    %v2770 = vlaneseq
    %v2771 = vshrl.u32 %v2770, 7
    %v2772 = vsub.s32 %v2769, %v2771
    %v2773 = vrot.slane %v2759, %v2772
    %v2774 = vcombine.low %v2766, %v2773
    %v2776 = vunpack.c.l.s4 1966171168
    %v2777 = vunpack.c.0.s8 %v2776
    %v2778 = vlaneseq
    %v2779 = vshrl.u32 %v2778, 7
    %v2780 = vsub.s32 %v2777, %v2779
    %v2781 = vrot.slane %v2774, %v2780
    %v2783 = vadd.f32 %v2666, %v2781
    %v2784 = vlaneseq
    %vm2785 = vcmp.ge.s32.totalorder %v2784, 0
    %vm2786 = vcmp.lt.s32.totalorder %v2784, 500
    %vm2787 = vmand %vm2785, %vm2786
    %2788 = vst.msk [vmem:[#allocation4] sm:$0xf] %vm2787, %v2783
    %2789 = vst.msk [vmem:[#allocation2] sm:$0x1] %vm2654, %v2632
    // Predicated region
    $region42: #{tpu_custom_call.1} parent=1 // pred_check
      %p2790 = pneg %p80
    $region43: #{tpu_custom_call.1} parent=1 // pred_check_branch
      %2792 = sbr.rel (%p2790) target = $region45
    $region44: #{tpu_custom_call.1} parent=1 // pred_region
      %v2793 = vld [vmem:[#allocation2] sm:$0x1]
      %2794 = vst.msk [vmem:[#allocation12] sm:$0x1] %vm2654, %v2793
      %v2795 = vld [vmem:[#allocation3] sm:$0x1]
      %2796 = vst.msk [vmem:[#allocation14] sm:$0x1] %vm2654, %v2795
      %v2797 = vld [vmem:[#allocation4] sm:$0xf]
      %2798 = vst.msk [vmem:[#allocation15] sm:$0xf] %vm2787, %v2797
    $region45: #{tpu_custom_call.1} parent=1 // pred_fallthru
      _
    // Predicated region
    $region46: #{tpu_custom_call.1} parent=1 // pred_check
      _
    $region47: #{tpu_custom_call.1} parent=1 // pred_check_branch
      %2800 = sbr.rel (0) target = $region49
    $region48: #{tpu_custom_call.1} parent=1 // pred_region
      %s2801 = sadd.s32 0, 0
      %s2803 = ssub.s32 16, 16
      %2804 = vsyncadd [#allocation7], %s2803
      %s2805 = smul.addr %s2801, 16
      %s2806 = scalar_lea.hbm %s6, %s2805
      %s2808 = sshll.u32 [#allocation11], 4
      %s2809 = int_to_ptr.vmem [resolvable:$true] %s2808
      %2811 = dma.vmem_to_hbm [thread:$0]  %s2809, 16, %s2806, [#allocation7]
    $region49: #{tpu_custom_call.1} parent=1 // pred_fallthru
      _
    // Predicated region
    $region50: #{tpu_custom_call.1} parent=1 // pred_check
      _
    $region51: #{tpu_custom_call.1} parent=1 // pred_check_branch
      %2813 = sbr.rel (0) target = $region53
    $region52: #{tpu_custom_call.1} parent=1 // pred_region
      %s2815 = ssub.s32 16, 16
      %2816 = vsyncadd [#allocation13], %s2815
      %s2818 = sshll.u32 [#allocation12], 4
      %s2819 = int_to_ptr.vmem [resolvable:$true] %s2818
      %2821 = dma.vmem_to_hbm [thread:$0]  %s2819, 16, %s7, [#allocation13]
    $region53: #{tpu_custom_call.1} parent=1 // pred_fallthru
      _
    // Predicated region
    $region54: #{tpu_custom_call.1} parent=1 // pred_check
      _
    $region55: #{tpu_custom_call.1} parent=1 // pred_check_branch
      %2823 = sbr.rel (0) target = $region57
    $region56: #{tpu_custom_call.1} parent=1 // pred_region
      %s2825 = ssub.s32 16, 16
      %2826 = vsyncadd [#allocation13], %s2825
      %s2828 = sshll.u32 [#allocation14], 4
      %s2829 = int_to_ptr.vmem [resolvable:$true] %s2828
      %2831 = dma.vmem_to_hbm [thread:$0]  %s2829, 16, %s8, [#allocation13]
    $region57: #{tpu_custom_call.1} parent=1 // pred_fallthru
      _
    // Predicated region
    $region58: #{tpu_custom_call.1} parent=1 // pred_check
      _
    $region59: #{tpu_custom_call.1} parent=1 // pred_check_branch
      %2833 = sbr.rel (0) target = $region61
    $region60: #{tpu_custom_call.1} parent=1 // pred_region
      %s2835 = ssub.s32 64, 64
      %2836 = vsyncadd [#allocation16], %s2835
      %s2838 = sshll.u32 [#allocation15], 4
      %s2839 = int_to_ptr.vmem [resolvable:$true] %s2838
      %2841 = dma.vmem_to_hbm [thread:$0]  %s2839, 64, %s9, [#allocation16]
    $region61: #{tpu_custom_call.1} parent=1 // pred_fallthru
      _
    // Predicated region
    $region62: #{tpu_custom_call.1} parent=1 // pred_check
      _
    $region63: #{tpu_custom_call.1} parent=1 // pred_check_branch
      %2843 = sbr.rel (0) target = $region65
    $region64: #{tpu_custom_call.1} parent=1 // pred_region
      %2844 = dma.done [#allocation7], 16
    $region65: #{tpu_custom_call.1} parent=1 // pred_fallthru
      _
    // Predicated region
    $region66: #{tpu_custom_call.1} parent=1 // pred_check
      _
    $region67: #{tpu_custom_call.1} parent=1 // pred_check_branch
      %2846 = sbr.rel (0) target = $region69
    $region68: #{tpu_custom_call.1} parent=1 // pred_region
      %2847 = dma.done [#allocation13], 16
    $region69: #{tpu_custom_call.1} parent=1 // pred_fallthru
      _
    // Predicated region
    $region70: #{tpu_custom_call.1} parent=1 // pred_check
      _
    $region71: #{tpu_custom_call.1} parent=1 // pred_check_branch
      %2849 = sbr.rel (0) target = $region73
    $region72: #{tpu_custom_call.1} parent=1 // pred_region
      %2850 = dma.done [#allocation13], 16
    $region73: #{tpu_custom_call.1} parent=1 // pred_fallthru
      _
    // Predicated region
    $region74: #{tpu_custom_call.1} parent=1 // pred_check
      _
    $region75: #{tpu_custom_call.1} parent=1 // pred_check_branch
      %2852 = sbr.rel (0) target = $region77
    $region76: #{tpu_custom_call.1} parent=1 // pred_region
      %2853 = dma.done [#allocation16], 64
    $region77: #{tpu_custom_call.1} parent=1 // pred_fallthru
      _
    %2854 = vsyncpa [#allocation6], 1
    %2855 = vsyncpa [#allocation9], 1
    %2856 = vsyncpa [#allocation7], 1
    %2857 = vsyncpa [#allocation13], 1
    %2858 = vsyncpa [#allocation16], 1

</llo_original>
